<compile_context>
chip_gen: v6e
topology: v6e:2x2x1
jax: 0.10.0
libtpu: 0.0.40
codegen_flags: <defaults>
</compile_context>

<pallas_src>
import functools

import jax
import jax.numpy as jnp
from jax import lax
from jax.experimental import pallas as pl
from jax.experimental.pallas import tpu as pltpu

H = 128          # LSTM hidden size (fixed by the module)
FC1 = 64         # fc1 output size
FC1_PAD = 128    # fc1 padded to a full lane group
BN_EPS = 1e-5


# ---------------------------------------------------------------------------
# Kernel
# ---------------------------------------------------------------------------
def kpnet_kernel(x_ref,                        # (T, Bblk, F)   f32
                 wih1_ref, whh1_ref, b1_ref,   # (F,4H) (H,4H) bf16, (1,4H) f32  [i,f,o,g]
                 bn_scale_ref, bn_shift_ref,   # (1,H) f32 each (folded BN running stats)
                 wih2_ref, b2_ref,             # (H,3H) bf16, (1,3H) f32         [i,o,g]
                 wfc1_ref, bfc1_ref,           # (H,128) bf16, (1,128) f32
                 wout_ref, bout_ref,           # (128,Cpad) bf16, (1,Cpad) f32
                 out_ref,                      # (Bblk, Cpad) f32
                 xproj_ref):                   # VMEM scratch (T, Bblk, 4H) f32
    T, B, F = x_ref.shape

    # ---- Hoisted LSTM1 input projection: one big matmul, bias added once. ----
    # Reshape only merges/splits leading dims (tile-preserving); result lives in
    # VMEM scratch, not vregs, so it doesn't pressure the register file.
    xt = x_ref[...].reshape(T * B, F).astype(jnp.bfloat16)
    proj = jnp.dot(xt, wih1_ref[...], preferred_element_type=jnp.float32) + b1_ref[...]
    xproj_ref[...] = proj.reshape(T, B, 4 * H)

    # ---- LSTM1 recurrence (only h @ W_hh left on the serial critical path) ----
    h0 = jnp.zeros((B, H), jnp.float32)
    c0 = jnp.zeros((B, H), jnp.float32)

    def body(t, carry):
        h, c = carry
        # W_hh read at the use site (kept as a VMEM matmul operand, not in vregs).
        gates = xproj_ref[t] + jnp.dot(h.astype(jnp.bfloat16), whh1_ref[...],
                                       preferred_element_type=jnp.float32)
        sg = jax.nn.sigmoid(gates[:, :3 * H])          # i | f | o : single EUP slab
        g = jnp.tanh(gates[:, 3 * H:])                 # g
        i, f, o = sg[:, :H], sg[:, H:2 * H], sg[:, 2 * H:]
        c_new = f * c + i * g
        h_new = o * jnp.tanh(c_new)
        return h_new, c_new

    h1, _ = lax.fori_loop(0, T, body, (h0, c0), unroll=True)

    # ---- BatchNorm1d (running stats folded to scale/shift) + ReLU ----
    o_bn = jnp.maximum(h1 * bn_scale_ref[...] + bn_shift_ref[...], 0.0)

    # ---- LSTM2: single step from zero state.  f*c == 0 and h@W_hh2 == 0, so only
    #      the input projection with gates (i, o, g) remains:  h2 = o * tanh(i * g).
    g2 = jnp.dot(o_bn.astype(jnp.bfloat16), wih2_ref[...],
                 preferred_element_type=jnp.float32) + b2_ref[...]
    sg2 = jax.nn.sigmoid(g2[:, :2 * H])                # i | o
    gg2 = jnp.tanh(g2[:, 2 * H:])                      # g
    h2 = sg2[:, H:2 * H] * jnp.tanh(sg2[:, :H] * gg2)

    # ---- fc1 + ReLU (dropout p=0.3 is identity in eval mode), lane-padded head ----
    f1 = jnp.maximum(jnp.dot(h2.astype(jnp.bfloat16), wfc1_ref[...],
                             preferred_element_type=jnp.float32) + bfc1_ref[...], 0.0)
    out_ref[...] = (jnp.dot(f1.astype(jnp.bfloat16), wout_ref[...],
                            preferred_element_type=jnp.float32) + bout_ref[...])


# ---------------------------------------------------------------------------
# Wrapper
# ---------------------------------------------------------------------------
@functools.partial(jax.jit, static_argnames=("n_classes",))
def kpnet_forward(x_btf, kparams, n_classes):
    """x_btf: (B, T, F) float32 (PyTorch batch_first). kparams: prepare_kernel_params()."""
    B, T, F = x_btf.shape

    # Pad batch to a sublane multiple and pick a batch block (grid over batch).
    if B <= 128:
        B_pad = max(8, ((B + 7) // 8) * 8)
        B_blk = B_pad
    else:
        B_pad = ((B + 127) // 128) * 128
        B_blk = 128
    grid = (B_pad // B_blk,)

    x_tbf = jnp.transpose(x_btf, (1, 0, 2))            # time-major (T, B, F)
    if B_pad != B:
        x_tbf = jnp.pad(x_tbf, ((0, 0), (0, B_pad - B), (0, 0)))

    c_pad = kparams["wout"].shape[1]

    in_specs = [
        pl.BlockSpec((T, B_blk, F), lambda b: (0, b, 0)),
        pl.BlockSpec(kparams["wih1"].shape, lambda b: (0, 0)),
        pl.BlockSpec(kparams["whh1"].shape, lambda b: (0, 0)),
        pl.BlockSpec(kparams["b1"].shape, lambda b: (0, 0)),
        pl.BlockSpec(kparams["bn_scale"].shape, lambda b: (0, 0)),
        pl.BlockSpec(kparams["bn_shift"].shape, lambda b: (0, 0)),
        pl.BlockSpec(kparams["wih2"].shape, lambda b: (0, 0)),
        pl.BlockSpec(kparams["b2"].shape, lambda b: (0, 0)),
        pl.BlockSpec(kparams["wfc1"].shape, lambda b: (0, 0)),
        pl.BlockSpec(kparams["bfc1"].shape, lambda b: (0, 0)),
        pl.BlockSpec(kparams["wout"].shape, lambda b: (0, 0)),
        pl.BlockSpec(kparams["bout"].shape, lambda b: (0, 0)),
    ]
    out_specs = pl.BlockSpec((B_blk, c_pad), lambda b: (b, 0))

    out_padded = pl.pallas_call(
        kpnet_kernel,
        out_shape=jax.ShapeDtypeStruct((B_pad, c_pad), jnp.float32),
        grid_spec=pltpu.PrefetchScalarGridSpec(
            num_scalar_prefetch=0,
            grid=grid,
            in_specs=in_specs,
            out_specs=out_specs,
            scratch_shapes=[pltpu.VMEM((T, B_blk, 4 * H), jnp.float32)],
        ),
        compiler_params=pltpu.CompilerParams(
            dimension_semantics=("parallel",),
            vmem_limit_bytes=32 * 1024 * 1024,
        ),
    )(x_tbf,
      kparams["wih1"], kparams["whh1"], kparams["b1"],
      kparams["bn_scale"], kparams["bn_shift"],
      kparams["wih2"], kparams["b2"],
      kparams["wfc1"], kparams["bfc1"],
      kparams["wout"], kparams["bout"])

    return out_padded[:B, :n_classes]


# ---------------------------------------------------------------------------
# Parameter construction / preparation
# ---------------------------------------------------------------------------
def init_params(key, feat_dim, n_classes):
    """PyTorch-convention synthetic parameters (gate order i,f,g,o; combined bias)."""
    ks = jax.random.split(key, 13)
    s1 = 1.0 / jnp.sqrt(H)

    def u(k, shape, s):
        return jax.random.uniform(k, shape, jnp.float32, -s, s)

    return {
        "wih1": u(ks[0], (feat_dim, 4 * H), s1),
        "whh1": u(ks[1], (H, 4 * H), s1),
        "b1":   u(ks[2], (1, 4 * H), s1),
        "gamma": 1.0 + 0.1 * u(ks[3], (1, H), 1.0),
        "beta":  0.1 * u(ks[4], (1, H), 1.0),
        "mean":  0.1 * u(ks[5], (1, H), 1.0),
        "var":   1.0 + 0.1 * jnp.abs(u(ks[6], (1, H), 1.0)),
        "wih2": u(ks[7], (H, 4 * H), s1),
        "whh2": u(ks[8], (H, 4 * H), s1),
        "b2":   u(ks[9], (1, 4 * H), s1),
        "wfc1": u(ks[10], (H, FC1), 1.0 / jnp.sqrt(H)),
        "bfc1": jnp.zeros((1, FC1), jnp.float32),
        "wout": u(ks[11], (FC1, n_classes), 1.0 / jnp.sqrt(FC1)),
        "bout": jnp.zeros((1, n_classes), jnp.float32),
    }


def _reorder_ifog(w):
    """Gate columns (i,f,g,o) -> (i,f,o,g) along the last axis."""
    return jnp.concatenate([w[..., :2 * H], w[..., 3 * H:4 * H], w[..., 2 * H:3 * H]],
                           axis=-1)


def _reorder_iog(w):
    """Gate columns (i,f,g,o) -> (i,o,g): drop the dead f-gate (zero initial state)."""
    return jnp.concatenate([w[..., :H], w[..., 3 * H:4 * H], w[..., 2 * H:3 * H]],
                           axis=-1)


def prepare_kernel_params(params):
    """Reorder gates, prune dead LSTM2 weights, fold BN, pad lanes, cast matmul
    operands to bf16."""
    bf16 = jnp.bfloat16
    n_classes = params["wout"].shape[1]
    c_pad = ((n_classes + 127) // 128) * 128

    bn_scale = params["gamma"] * lax.rsqrt(params["var"] + BN_EPS)
    bn_shift = params["beta"] - params["mean"] * bn_scale

    wfc1 = jnp.zeros((H, FC1_PAD), jnp.float32).at[:, :FC1].set(params["wfc1"])
    bfc1 = jnp.zeros((1, FC1_PAD), jnp.float32).at[:, :FC1].set(params["bfc1"])
    wout = jnp.zeros((FC1_PAD, c_pad), jnp.float32).at[:FC1, :n_classes].set(params["wout"])
    bout = jnp.zeros((1, c_pad), jnp.float32).at[:, :n_classes].set(params["bout"])

    return {
        "wih1": _reorder_ifog(params["wih1"]).astype(bf16),
        "whh1": _reorder_ifog(params["whh1"]).astype(bf16),
        "b1":   _reorder_ifog(params["b1"]),
        "bn_scale": bn_scale,
        "bn_shift": bn_shift,
        "wih2": _reorder_iog(params["wih2"]).astype(bf16),   # whh2 dropped entirely
        "b2":   _reorder_iog(params["b2"]),
        "wfc1": wfc1.astype(bf16), "bfc1": bfc1,
        "wout": wout.astype(bf16), "bout": bout,
    }


# ---------------------------------------------------------------------------
# Pure-JAX reference (PyTorch gate order / formulas) for validation
# ---------------------------------------------------------------------------
def kpnet_reference(x_btf, params, matmul_dtype=jnp.float32):
    md = matmul_dtype

    def dot(a, b):
        return jnp.dot(a.astype(md), b.astype(md), preferred_element_type=jnp.float32)

    def step(x_t, h, c, wih, whh, b):
        gates = dot(x_t, wih) + dot(h, whh) + b
        i = jax.nn.sigmoid(gates[:, :H])
        f = jax.nn.sigmoid(gates[:, H:2 * H])
        g = jnp.tanh(gates[:, 2 * H:3 * H])
        o = jax.nn.sigmoid(gates[:, 3 * H:])
        c_new = f * c + i * g
        return o * jnp.tanh(c_new), c_new

    B = x_btf.shape[0]
    h = jnp.zeros((B, H), jnp.float32)
    c = jnp.zeros((B, H), jnp.float32)
    for t in range(x_btf.shape[1]):
        h, c = step(x_btf[:, t, :], h, c, params["wih1"], params["whh1"], params["b1"])
    o = (h - params["mean"]) * lax.rsqrt(params["var"] + BN_EPS)
    o = jnp.maximum(o * params["gamma"] + params["beta"], 0.0)
    h2, _ = step(o, jnp.zeros((B, H), jnp.float32), jnp.zeros((B, H), jnp.float32),
                 params["wih2"], params["whh2"], params["b2"])
    f1 = jnp.maximum(dot(h2, params["wfc1"]) + params["bfc1"], 0.0)
    return dot(f1, params["wout"]) + params["bout"]


if __name__ == "__main__":
    # Small shapes implied by the forward: x is (batch, time_steps, feat_dim)
    B, T, F, N_CLASSES = 2, 8, 32, 5

    key = jax.random.PRNGKey(0)
    kx, kp = jax.random.split(key)
    x = jax.random.normal(kx, (B, T, F), jnp.float32)
    params = init_params(kp, F, N_CLASSES)
    kparams = prepare_kernel_params(params)

    out = kpnet_forward(x, kparams, N_CLASSES)
    out = jax.block_until_ready(out)
    assert out.shape == (B, N_CLASSES), out.shape

    # Structural check: reference using the same bf16-matmul / f32-accumulate recipe.
    ref_match = kpnet_reference(x, params, matmul_dtype=jnp.bfloat16)
    assert jnp.allclose(out, ref_match, atol=1e-3, rtol=1e-3), (
        f"max err vs matched (bf16-matmul) reference: {jnp.max(jnp.abs(out - ref_match))}")

    # Semantic sanity check against the full-f32 PyTorch-faithful reference.
    ref_f32 = kpnet_reference(x, params, matmul_dtype=jnp.float32)
    assert jnp.allclose(out, ref_f32, atol=5e-2, rtol=5e-2), (
        f"max err vs f32 reference: {jnp.max(jnp.abs(out - ref_f32))}")

    print("KERNEL_OK")
</pallas_src>

<mosaic_0001>
module attributes {stable_mosaic.version = 11 : i64} {
  func.func @kpnet_kernel(%arg0: i32, %arg1: memref<8x8x32xf32, #tpu.memory_space<vmem>>, %arg2: memref<32x512xbf16, #tpu.memory_space<vmem>>, %arg3: memref<128x512xbf16, #tpu.memory_space<vmem>>, %arg4: memref<1x512xf32, #tpu.memory_space<vmem>>, %arg5: memref<1x128xf32, #tpu.memory_space<vmem>>, %arg6: memref<1x128xf32, #tpu.memory_space<vmem>>, %arg7: memref<128x384xbf16, #tpu.memory_space<vmem>>, %arg8: memref<1x384xf32, #tpu.memory_space<vmem>>, %arg9: memref<128x128xbf16, #tpu.memory_space<vmem>>, %arg10: memref<1x128xf32, #tpu.memory_space<vmem>>, %arg11: memref<128x128xbf16, #tpu.memory_space<vmem>>, %arg12: memref<1x128xf32, #tpu.memory_space<vmem>>, %arg13: memref<8x128xf32, #tpu.memory_space<vmem>>, %arg14: memref<8x8x512xf32, #tpu.memory_space<vmem>>) attributes {dimension_semantics = [#tpu.dimension_semantics<parallel>], iteration_bounds = array<i64: 1>, scalar_prefetch = 0 : i64, scratch_operands = 1 : i64, tpu.core_type = #tpu.core_type<tc>, window_params = [{transform_indices = @transform_0, window_bounds = array<i64: 8, 8, 32>}, {pipeline_mode = #tpu.pipeline_mode<synchronous>, transform_indices = @transform_1, window_bounds = array<i64: 32, 512>}, {pipeline_mode = #tpu.pipeline_mode<synchronous>, transform_indices = @transform_2, window_bounds = array<i64: 128, 512>}, {pipeline_mode = #tpu.pipeline_mode<synchronous>, transform_indices = @transform_3, window_bounds = array<i64: 1, 512>}, {pipeline_mode = #tpu.pipeline_mode<synchronous>, transform_indices = @transform_4, window_bounds = array<i64: 1, 128>}, {pipeline_mode = #tpu.pipeline_mode<synchronous>, transform_indices = @transform_5, window_bounds = array<i64: 1, 128>}, {pipeline_mode = #tpu.pipeline_mode<synchronous>, transform_indices = @transform_6, window_bounds = array<i64: 128, 384>}, {pipeline_mode = #tpu.pipeline_mode<synchronous>, transform_indices = @transform_7, window_bounds = array<i64: 1, 384>}, {pipeline_mode = #tpu.pipeline_mode<synchronous>, transform_indices = @transform_8, window_bounds = array<i64: 128, 128>}, {pipeline_mode = #tpu.pipeline_mode<synchronous>, transform_indices = @transform_9, window_bounds = array<i64: 1, 128>}, {pipeline_mode = #tpu.pipeline_mode<synchronous>, transform_indices = @transform_10, window_bounds = array<i64: 128, 128>}, {pipeline_mode = #tpu.pipeline_mode<synchronous>, transform_indices = @transform_11, window_bounds = array<i64: 1, 128>}, {transform_indices = @transform_12, window_bounds = array<i64: 8, 128>}]} {
    %c0 = arith.constant 0 : index
    %c0_0 = arith.constant 0 : index
    %c0_1 = arith.constant 0 : index
    %0 = vector.load %arg1[%c0, %c0_0, %c0_1] : memref<8x8x32xf32, #tpu.memory_space<vmem>>, vector<8x8x32xf32>
    %1 = vector.shape_cast %0 : vector<8x8x32xf32> to vector<64x32xf32>
    %2 = arith.truncf %1 : vector<64x32xf32> to vector<64x32xbf16>
    %c0_2 = arith.constant 0 : index
    %c0_3 = arith.constant 0 : index
    %3 = vector.load %arg2[%c0_2, %c0_3] : memref<32x512xbf16, #tpu.memory_space<vmem>>, vector<32x512xbf16>
    %cst = arith.constant dense<0.000000e+00> : vector<64x512xf32>
    %4 = tpu.matmul %2, %3, %cst {dimension_numbers = #tpu.dot_dimension_numbers<[1], [0], [0], [1], [0, 0, 1, 1], [], []>} : vector<64x32xbf16>, vector<32x512xbf16>, vector<64x512xf32> -> vector<64x512xf32>
    %c0_4 = arith.constant 0 : index
    %c0_5 = arith.constant 0 : index
    %5 = vector.load %arg4[%c0_4, %c0_5] : memref<1x512xf32, #tpu.memory_space<vmem>>, vector<1x512xf32>
    %6 = vector.broadcast %5 : vector<1x512xf32> to vector<64x512xf32>
    %7 = arith.addf %4, %6 : vector<64x512xf32>
    %8 = vector.shape_cast %7 : vector<64x512xf32> to vector<8x8x512xf32>
    %c0_6 = arith.constant 0 : index
    %c0_7 = arith.constant 0 : index
    %c0_8 = arith.constant 0 : index
    %9 = vector.load %arg14[%c0_6, %c0_7, %c0_8] : memref<8x8x512xf32, #tpu.memory_space<vmem>>, vector<8x8x512xf32>
    tpu.vector_store %arg14[%c0_6, %c0_7, %c0_8], %8 {strides = array<i32>} : memref<8x8x512xf32, #tpu.memory_space<vmem>>, vector<8x8x512xf32>,
    %cst_9 = arith.constant 0.000000e+00 : f32
    %10 = vector.broadcast %cst_9 : f32 to vector<8x128xf32>
    %cst_10 = arith.constant 0.000000e+00 : f32
    %11 = vector.broadcast %cst_10 : f32 to vector<8x128xf32>
    %c0_i32 = arith.constant 0 : i32
    %12 = arith.index_cast %c0_i32 : i32 to index
    %c0_11 = arith.constant 0 : index
    %c0_12 = arith.constant 0 : index
    %13 = vector.load %arg14[%12, %c0_11, %c0_12] : memref<8x8x512xf32, #tpu.memory_space<vmem>>, vector<1x8x512xf32>
    %14 = vector.shape_cast %13 : vector<1x8x512xf32> to vector<8x512xf32>
    %15 = arith.truncf %10 : vector<8x128xf32> to vector<8x128xbf16>
    %c0_13 = arith.constant 0 : index
    %c0_14 = arith.constant 0 : index
    %16 = vector.load %arg3[%c0_13, %c0_14] : memref<128x512xbf16, #tpu.memory_space<vmem>>, vector<128x512xbf16>
    %cst_15 = arith.constant dense<0.000000e+00> : vector<8x512xf32>
    %17 = tpu.matmul %15, %16, %cst_15 {dimension_numbers = #tpu.dot_dimension_numbers<[1], [0], [0], [1], [0, 0, 1, 1], [], []>} : vector<8x128xbf16>, vector<128x512xbf16>, vector<8x512xf32> -> vector<8x512xf32>
    %18 = arith.addf %14, %17 : vector<8x512xf32>
    %19 = vector.extract_strided_slice %18 {offsets = [0, 0], sizes = [8, 384], strides = [1, 1]} : vector<8x512xf32> to vector<8x384xf32>
    %20 = arith.negf %19 : vector<8x384xf32>
    %21 = math.exp %20 : vector<8x384xf32>
    %cst_16 = arith.constant 1.000000e+00 : f32
    %22 = vector.broadcast %cst_16 : f32 to vector<8x384xf32>
    %23 = arith.addf %22, %21 : vector<8x384xf32>
    %24 = arith.divf %22, %23 : vector<8x384xf32>
    %25 = vector.extract_strided_slice %18 {offsets = [0, 384], sizes = [8, 128], strides = [1, 1]} : vector<8x512xf32> to vector<8x128xf32>
    %26 = math.tanh %25 : vector<8x128xf32>
    %27 = vector.extract_strided_slice %24 {offsets = [0, 0], sizes = [8, 128], strides = [1, 1]} : vector<8x384xf32> to vector<8x128xf32>
    %28 = vector.extract_strided_slice %24 {offsets = [0, 128], sizes = [8, 128], strides = [1, 1]} : vector<8x384xf32> to vector<8x128xf32>
    %29 = vector.extract_strided_slice %24 {offsets = [0, 256], sizes = [8, 128], strides = [1, 1]} : vector<8x384xf32> to vector<8x128xf32>
    %30 = arith.mulf %28, %11 : vector<8x128xf32>
    %31 = arith.mulf %27, %26 : vector<8x128xf32>
    %32 = arith.addf %30, %31 : vector<8x128xf32>
    %33 = math.tanh %32 : vector<8x128xf32>
    %34 = arith.mulf %29, %33 : vector<8x128xf32>
    %c1_i32 = arith.constant 1 : i32
    %35 = arith.index_cast %c1_i32 : i32 to index
    %c0_17 = arith.constant 0 : index
    %c0_18 = arith.constant 0 : index
    %36 = vector.load %arg14[%35, %c0_17, %c0_18] : memref<8x8x512xf32, #tpu.memory_space<vmem>>, vector<1x8x512xf32>
    %37 = vector.shape_cast %36 : vector<1x8x512xf32> to vector<8x512xf32>
    %38 = arith.truncf %34 : vector<8x128xf32> to vector<8x128xbf16>
    %c0_19 = arith.constant 0 : index
    %c0_20 = arith.constant 0 : index
    %39 = vector.load %arg3[%c0_19, %c0_20] : memref<128x512xbf16, #tpu.memory_space<vmem>>, vector<128x512xbf16>
    %cst_21 = arith.constant dense<0.000000e+00> : vector<8x512xf32>
    %40 = tpu.matmul %38, %39, %cst_21 {dimension_numbers = #tpu.dot_dimension_numbers<[1], [0], [0], [1], [0, 0, 1, 1], [], []>} : vector<8x128xbf16>, vector<128x512xbf16>, vector<8x512xf32> -> vector<8x512xf32>
    %41 = arith.addf %37, %40 : vector<8x512xf32>
    %42 = vector.extract_strided_slice %41 {offsets = [0, 0], sizes = [8, 384], strides = [1, 1]} : vector<8x512xf32> to vector<8x384xf32>
    %43 = arith.negf %42 : vector<8x384xf32>
    %44 = math.exp %43 : vector<8x384xf32>
    %cst_22 = arith.constant 1.000000e+00 : f32
    %45 = vector.broadcast %cst_22 : f32 to vector<8x384xf32>
    %46 = arith.addf %45, %44 : vector<8x384xf32>
    %47 = arith.divf %45, %46 : vector<8x384xf32>
    %48 = vector.extract_strided_slice %41 {offsets = [0, 384], sizes = [8, 128], strides = [1, 1]} : vector<8x512xf32> to vector<8x128xf32>
    %49 = math.tanh %48 : vector<8x128xf32>
    %50 = vector.extract_strided_slice %47 {offsets = [0, 0], sizes = [8, 128], strides = [1, 1]} : vector<8x384xf32> to vector<8x128xf32>
    %51 = vector.extract_strided_slice %47 {offsets = [0, 128], sizes = [8, 128], strides = [1, 1]} : vector<8x384xf32> to vector<8x128xf32>
    %52 = vector.extract_strided_slice %47 {offsets = [0, 256], sizes = [8, 128], strides = [1, 1]} : vector<8x384xf32> to vector<8x128xf32>
    %53 = arith.mulf %51, %32 : vector<8x128xf32>
    %54 = arith.mulf %50, %49 : vector<8x128xf32>
    %55 = arith.addf %53, %54 : vector<8x128xf32>
    %56 = math.tanh %55 : vector<8x128xf32>
    %57 = arith.mulf %52, %56 : vector<8x128xf32>
    %c2_i32 = arith.constant 2 : i32
    %58 = arith.index_cast %c2_i32 : i32 to index
    %c0_23 = arith.constant 0 : index
    %c0_24 = arith.constant 0 : index
    %59 = vector.load %arg14[%58, %c0_23, %c0_24] : memref<8x8x512xf32, #tpu.memory_space<vmem>>, vector<1x8x512xf32>
    %60 = vector.shape_cast %59 : vector<1x8x512xf32> to vector<8x512xf32>
    %61 = arith.truncf %57 : vector<8x128xf32> to vector<8x128xbf16>
    %c0_25 = arith.constant 0 : index
    %c0_26 = arith.constant 0 : index
    %62 = vector.load %arg3[%c0_25, %c0_26] : memref<128x512xbf16, #tpu.memory_space<vmem>>, vector<128x512xbf16>
    %cst_27 = arith.constant dense<0.000000e+00> : vector<8x512xf32>
    %63 = tpu.matmul %61, %62, %cst_27 {dimension_numbers = #tpu.dot_dimension_numbers<[1], [0], [0], [1], [0, 0, 1, 1], [], []>} : vector<8x128xbf16>, vector<128x512xbf16>, vector<8x512xf32> -> vector<8x512xf32>
    %64 = arith.addf %60, %63 : vector<8x512xf32>
    %65 = vector.extract_strided_slice %64 {offsets = [0, 0], sizes = [8, 384], strides = [1, 1]} : vector<8x512xf32> to vector<8x384xf32>
    %66 = arith.negf %65 : vector<8x384xf32>
    %67 = math.exp %66 : vector<8x384xf32>
    %cst_28 = arith.constant 1.000000e+00 : f32
    %68 = vector.broadcast %cst_28 : f32 to vector<8x384xf32>
    %69 = arith.addf %68, %67 : vector<8x384xf32>
    %70 = arith.divf %68, %69 : vector<8x384xf32>
    %71 = vector.extract_strided_slice %64 {offsets = [0, 384], sizes = [8, 128], strides = [1, 1]} : vector<8x512xf32> to vector<8x128xf32>
    %72 = math.tanh %71 : vector<8x128xf32>
    %73 = vector.extract_strided_slice %70 {offsets = [0, 0], sizes = [8, 128], strides = [1, 1]} : vector<8x384xf32> to vector<8x128xf32>
    %74 = vector.extract_strided_slice %70 {offsets = [0, 128], sizes = [8, 128], strides = [1, 1]} : vector<8x384xf32> to vector<8x128xf32>
    %75 = vector.extract_strided_slice %70 {offsets = [0, 256], sizes = [8, 128], strides = [1, 1]} : vector<8x384xf32> to vector<8x128xf32>
    %76 = arith.mulf %74, %55 : vector<8x128xf32>
    %77 = arith.mulf %73, %72 : vector<8x128xf32>
    %78 = arith.addf %76, %77 : vector<8x128xf32>
    %79 = math.tanh %78 : vector<8x128xf32>
    %80 = arith.mulf %75, %79 : vector<8x128xf32>
    %c3_i32 = arith.constant 3 : i32
    %81 = arith.index_cast %c3_i32 : i32 to index
    %c0_29 = arith.constant 0 : index
    %c0_30 = arith.constant 0 : index
    %82 = vector.load %arg14[%81, %c0_29, %c0_30] : memref<8x8x512xf32, #tpu.memory_space<vmem>>, vector<1x8x512xf32>
    %83 = vector.shape_cast %82 : vector<1x8x512xf32> to vector<8x512xf32>
    %84 = arith.truncf %80 : vector<8x128xf32> to vector<8x128xbf16>
    %c0_31 = arith.constant 0 : index
    %c0_32 = arith.constant 0 : index
    %85 = vector.load %arg3[%c0_31, %c0_32] : memref<128x512xbf16, #tpu.memory_space<vmem>>, vector<128x512xbf16>
    %cst_33 = arith.constant dense<0.000000e+00> : vector<8x512xf32>
    %86 = tpu.matmul %84, %85, %cst_33 {dimension_numbers = #tpu.dot_dimension_numbers<[1], [0], [0], [1], [0, 0, 1, 1], [], []>} : vector<8x128xbf16>, vector<128x512xbf16>, vector<8x512xf32> -> vector<8x512xf32>
    %87 = arith.addf %83, %86 : vector<8x512xf32>
    %88 = vector.extract_strided_slice %87 {offsets = [0, 0], sizes = [8, 384], strides = [1, 1]} : vector<8x512xf32> to vector<8x384xf32>
    %89 = arith.negf %88 : vector<8x384xf32>
    %90 = math.exp %89 : vector<8x384xf32>
    %cst_34 = arith.constant 1.000000e+00 : f32
    %91 = vector.broadcast %cst_34 : f32 to vector<8x384xf32>
    %92 = arith.addf %91, %90 : vector<8x384xf32>
    %93 = arith.divf %91, %92 : vector<8x384xf32>
    %94 = vector.extract_strided_slice %87 {offsets = [0, 384], sizes = [8, 128], strides = [1, 1]} : vector<8x512xf32> to vector<8x128xf32>
    %95 = math.tanh %94 : vector<8x128xf32>
    %96 = vector.extract_strided_slice %93 {offsets = [0, 0], sizes = [8, 128], strides = [1, 1]} : vector<8x384xf32> to vector<8x128xf32>
    %97 = vector.extract_strided_slice %93 {offsets = [0, 128], sizes = [8, 128], strides = [1, 1]} : vector<8x384xf32> to vector<8x128xf32>
    %98 = vector.extract_strided_slice %93 {offsets = [0, 256], sizes = [8, 128], strides = [1, 1]} : vector<8x384xf32> to vector<8x128xf32>
    %99 = arith.mulf %97, %78 : vector<8x128xf32>
    %100 = arith.mulf %96, %95 : vector<8x128xf32>
    %101 = arith.addf %99, %100 : vector<8x128xf32>
    %102 = math.tanh %101 : vector<8x128xf32>
    %103 = arith.mulf %98, %102 : vector<8x128xf32>
    %c4_i32 = arith.constant 4 : i32
    %104 = arith.index_cast %c4_i32 : i32 to index
    %c0_35 = arith.constant 0 : index
    %c0_36 = arith.constant 0 : index
    %105 = vector.load %arg14[%104, %c0_35, %c0_36] : memref<8x8x512xf32, #tpu.memory_space<vmem>>, vector<1x8x512xf32>
    %106 = vector.shape_cast %105 : vector<1x8x512xf32> to vector<8x512xf32>
    %107 = arith.truncf %103 : vector<8x128xf32> to vector<8x128xbf16>
    %c0_37 = arith.constant 0 : index
    %c0_38 = arith.constant 0 : index
    %108 = vector.load %arg3[%c0_37, %c0_38] : memref<128x512xbf16, #tpu.memory_space<vmem>>, vector<128x512xbf16>
    %cst_39 = arith.constant dense<0.000000e+00> : vector<8x512xf32>
    %109 = tpu.matmul %107, %108, %cst_39 {dimension_numbers = #tpu.dot_dimension_numbers<[1], [0], [0], [1], [0, 0, 1, 1], [], []>} : vector<8x128xbf16>, vector<128x512xbf16>, vector<8x512xf32> -> vector<8x512xf32>
    %110 = arith.addf %106, %109 : vector<8x512xf32>
    %111 = vector.extract_strided_slice %110 {offsets = [0, 0], sizes = [8, 384], strides = [1, 1]} : vector<8x512xf32> to vector<8x384xf32>
    %112 = arith.negf %111 : vector<8x384xf32>
    %113 = math.exp %112 : vector<8x384xf32>
    %cst_40 = arith.constant 1.000000e+00 : f32
    %114 = vector.broadcast %cst_40 : f32 to vector<8x384xf32>
    %115 = arith.addf %114, %113 : vector<8x384xf32>
    %116 = arith.divf %114, %115 : vector<8x384xf32>
    %117 = vector.extract_strided_slice %110 {offsets = [0, 384], sizes = [8, 128], strides = [1, 1]} : vector<8x512xf32> to vector<8x128xf32>
    %118 = math.tanh %117 : vector<8x128xf32>
    %119 = vector.extract_strided_slice %116 {offsets = [0, 0], sizes = [8, 128], strides = [1, 1]} : vector<8x384xf32> to vector<8x128xf32>
    %120 = vector.extract_strided_slice %116 {offsets = [0, 128], sizes = [8, 128], strides = [1, 1]} : vector<8x384xf32> to vector<8x128xf32>
    %121 = vector.extract_strided_slice %116 {offsets = [0, 256], sizes = [8, 128], strides = [1, 1]} : vector<8x384xf32> to vector<8x128xf32>
    %122 = arith.mulf %120, %101 : vector<8x128xf32>
    %123 = arith.mulf %119, %118 : vector<8x128xf32>
    %124 = arith.addf %122, %123 : vector<8x128xf32>
    %125 = math.tanh %124 : vector<8x128xf32>
    %126 = arith.mulf %121, %125 : vector<8x128xf32>
    %c5_i32 = arith.constant 5 : i32
    %127 = arith.index_cast %c5_i32 : i32 to index
    %c0_41 = arith.constant 0 : index
    %c0_42 = arith.constant 0 : index
    %128 = vector.load %arg14[%127, %c0_41, %c0_42] : memref<8x8x512xf32, #tpu.memory_space<vmem>>, vector<1x8x512xf32>
    %129 = vector.shape_cast %128 : vector<1x8x512xf32> to vector<8x512xf32>
    %130 = arith.truncf %126 : vector<8x128xf32> to vector<8x128xbf16>
    %c0_43 = arith.constant 0 : index
    %c0_44 = arith.constant 0 : index
    %131 = vector.load %arg3[%c0_43, %c0_44] : memref<128x512xbf16, #tpu.memory_space<vmem>>, vector<128x512xbf16>
    %cst_45 = arith.constant dense<0.000000e+00> : vector<8x512xf32>
    %132 = tpu.matmul %130, %131, %cst_45 {dimension_numbers = #tpu.dot_dimension_numbers<[1], [0], [0], [1], [0, 0, 1, 1], [], []>} : vector<8x128xbf16>, vector<128x512xbf16>, vector<8x512xf32> -> vector<8x512xf32>
    %133 = arith.addf %129, %132 : vector<8x512xf32>
    %134 = vector.extract_strided_slice %133 {offsets = [0, 0], sizes = [8, 384], strides = [1, 1]} : vector<8x512xf32> to vector<8x384xf32>
    %135 = arith.negf %134 : vector<8x384xf32>
    %136 = math.exp %135 : vector<8x384xf32>
    %cst_46 = arith.constant 1.000000e+00 : f32
    %137 = vector.broadcast %cst_46 : f32 to vector<8x384xf32>
    %138 = arith.addf %137, %136 : vector<8x384xf32>
    %139 = arith.divf %137, %138 : vector<8x384xf32>
    %140 = vector.extract_strided_slice %133 {offsets = [0, 384], sizes = [8, 128], strides = [1, 1]} : vector<8x512xf32> to vector<8x128xf32>
    %141 = math.tanh %140 : vector<8x128xf32>
    %142 = vector.extract_strided_slice %139 {offsets = [0, 0], sizes = [8, 128], strides = [1, 1]} : vector<8x384xf32> to vector<8x128xf32>
    %143 = vector.extract_strided_slice %139 {offsets = [0, 128], sizes = [8, 128], strides = [1, 1]} : vector<8x384xf32> to vector<8x128xf32>
    %144 = vector.extract_strided_slice %139 {offsets = [0, 256], sizes = [8, 128], strides = [1, 1]} : vector<8x384xf32> to vector<8x128xf32>
    %145 = arith.mulf %143, %124 : vector<8x128xf32>
    %146 = arith.mulf %142, %141 : vector<8x128xf32>
    %147 = arith.addf %145, %146 : vector<8x128xf32>
    %148 = math.tanh %147 : vector<8x128xf32>
    %149 = arith.mulf %144, %148 : vector<8x128xf32>
    %c6_i32 = arith.constant 6 : i32
    %150 = arith.index_cast %c6_i32 : i32 to index
    %c0_47 = arith.constant 0 : index
    %c0_48 = arith.constant 0 : index
    %151 = vector.load %arg14[%150, %c0_47, %c0_48] : memref<8x8x512xf32, #tpu.memory_space<vmem>>, vector<1x8x512xf32>
    %152 = vector.shape_cast %151 : vector<1x8x512xf32> to vector<8x512xf32>
    %153 = arith.truncf %149 : vector<8x128xf32> to vector<8x128xbf16>
    %c0_49 = arith.constant 0 : index
    %c0_50 = arith.constant 0 : index
    %154 = vector.load %arg3[%c0_49, %c0_50] : memref<128x512xbf16, #tpu.memory_space<vmem>>, vector<128x512xbf16>
    %cst_51 = arith.constant dense<0.000000e+00> : vector<8x512xf32>
    %155 = tpu.matmul %153, %154, %cst_51 {dimension_numbers = #tpu.dot_dimension_numbers<[1], [0], [0], [1], [0, 0, 1, 1], [], []>} : vector<8x128xbf16>, vector<128x512xbf16>, vector<8x512xf32> -> vector<8x512xf32>
    %156 = arith.addf %152, %155 : vector<8x512xf32>
    %157 = vector.extract_strided_slice %156 {offsets = [0, 0], sizes = [8, 384], strides = [1, 1]} : vector<8x512xf32> to vector<8x384xf32>
    %158 = arith.negf %157 : vector<8x384xf32>
    %159 = math.exp %158 : vector<8x384xf32>
    %cst_52 = arith.constant 1.000000e+00 : f32
    %160 = vector.broadcast %cst_52 : f32 to vector<8x384xf32>
    %161 = arith.addf %160, %159 : vector<8x384xf32>
    %162 = arith.divf %160, %161 : vector<8x384xf32>
    %163 = vector.extract_strided_slice %156 {offsets = [0, 384], sizes = [8, 128], strides = [1, 1]} : vector<8x512xf32> to vector<8x128xf32>
    %164 = math.tanh %163 : vector<8x128xf32>
    %165 = vector.extract_strided_slice %162 {offsets = [0, 0], sizes = [8, 128], strides = [1, 1]} : vector<8x384xf32> to vector<8x128xf32>
    %166 = vector.extract_strided_slice %162 {offsets = [0, 128], sizes = [8, 128], strides = [1, 1]} : vector<8x384xf32> to vector<8x128xf32>
    %167 = vector.extract_strided_slice %162 {offsets = [0, 256], sizes = [8, 128], strides = [1, 1]} : vector<8x384xf32> to vector<8x128xf32>
    %168 = arith.mulf %166, %147 : vector<8x128xf32>
    %169 = arith.mulf %165, %164 : vector<8x128xf32>
    %170 = arith.addf %168, %169 : vector<8x128xf32>
    %171 = math.tanh %170 : vector<8x128xf32>
    %172 = arith.mulf %167, %171 : vector<8x128xf32>
    %c7_i32 = arith.constant 7 : i32
    %173 = arith.index_cast %c7_i32 : i32 to index
    %c0_53 = arith.constant 0 : index
    %c0_54 = arith.constant 0 : index
    %174 = vector.load %arg14[%173, %c0_53, %c0_54] : memref<8x8x512xf32, #tpu.memory_space<vmem>>, vector<1x8x512xf32>
    %175 = vector.shape_cast %174 : vector<1x8x512xf32> to vector<8x512xf32>
    %176 = arith.truncf %172 : vector<8x128xf32> to vector<8x128xbf16>
    %c0_55 = arith.constant 0 : index
    %c0_56 = arith.constant 0 : index
    %177 = vector.load %arg3[%c0_55, %c0_56] : memref<128x512xbf16, #tpu.memory_space<vmem>>, vector<128x512xbf16>
    %cst_57 = arith.constant dense<0.000000e+00> : vector<8x512xf32>
    %178 = tpu.matmul %176, %177, %cst_57 {dimension_numbers = #tpu.dot_dimension_numbers<[1], [0], [0], [1], [0, 0, 1, 1], [], []>} : vector<8x128xbf16>, vector<128x512xbf16>, vector<8x512xf32> -> vector<8x512xf32>
    %179 = arith.addf %175, %178 : vector<8x512xf32>
    %180 = vector.extract_strided_slice %179 {offsets = [0, 0], sizes = [8, 384], strides = [1, 1]} : vector<8x512xf32> to vector<8x384xf32>
    %181 = arith.negf %180 : vector<8x384xf32>
    %182 = math.exp %181 : vector<8x384xf32>
    %cst_58 = arith.constant 1.000000e+00 : f32
    %183 = vector.broadcast %cst_58 : f32 to vector<8x384xf32>
    %184 = arith.addf %183, %182 : vector<8x384xf32>
    %185 = arith.divf %183, %184 : vector<8x384xf32>
    %186 = vector.extract_strided_slice %179 {offsets = [0, 384], sizes = [8, 128], strides = [1, 1]} : vector<8x512xf32> to vector<8x128xf32>
    %187 = math.tanh %186 : vector<8x128xf32>
    %188 = vector.extract_strided_slice %185 {offsets = [0, 0], sizes = [8, 128], strides = [1, 1]} : vector<8x384xf32> to vector<8x128xf32>
    %189 = vector.extract_strided_slice %185 {offsets = [0, 128], sizes = [8, 128], strides = [1, 1]} : vector<8x384xf32> to vector<8x128xf32>
    %190 = vector.extract_strided_slice %185 {offsets = [0, 256], sizes = [8, 128], strides = [1, 1]} : vector<8x384xf32> to vector<8x128xf32>
    %191 = arith.mulf %189, %170 : vector<8x128xf32>
    %192 = arith.mulf %188, %187 : vector<8x128xf32>
    %193 = arith.addf %191, %192 : vector<8x128xf32>
    %194 = math.tanh %193 : vector<8x128xf32>
    %195 = arith.mulf %190, %194 : vector<8x128xf32>
    %c8_i32 = arith.constant 8 : i32
    %c0_59 = arith.constant 0 : index
    %c0_60 = arith.constant 0 : index
    %196 = vector.load %arg5[%c0_59, %c0_60] : memref<1x128xf32, #tpu.memory_space<vmem>>, vector<1x128xf32>
    %197 = vector.broadcast %196 : vector<1x128xf32> to vector<8x128xf32>
    %198 = arith.mulf %195, %197 : vector<8x128xf32>
    %c0_61 = arith.constant 0 : index
    %c0_62 = arith.constant 0 : index
    %199 = vector.load %arg6[%c0_61, %c0_62] : memref<1x128xf32, #tpu.memory_space<vmem>>, vector<1x128xf32>
    %200 = vector.broadcast %199 : vector<1x128xf32> to vector<8x128xf32>
    %201 = arith.addf %198, %200 : vector<8x128xf32>
    %cst_63 = arith.constant 0.000000e+00 : f32
    %202 = vector.broadcast %cst_63 : f32 to vector<8x128xf32>
    %203 = arith.maximumf %201, %202 : vector<8x128xf32>
    %204 = arith.truncf %203 : vector<8x128xf32> to vector<8x128xbf16>
    %c0_64 = arith.constant 0 : index
    %c0_65 = arith.constant 0 : index
    %205 = vector.load %arg7[%c0_64, %c0_65] : memref<128x384xbf16, #tpu.memory_space<vmem>>, vector<128x384xbf16>
    %cst_66 = arith.constant dense<0.000000e+00> : vector<8x384xf32>
    %206 = tpu.matmul %204, %205, %cst_66 {dimension_numbers = #tpu.dot_dimension_numbers<[1], [0], [0], [1], [0, 0, 1, 1], [], []>} : vector<8x128xbf16>, vector<128x384xbf16>, vector<8x384xf32> -> vector<8x384xf32>
    %c0_67 = arith.constant 0 : index
    %c0_68 = arith.constant 0 : index
    %207 = vector.load %arg8[%c0_67, %c0_68] : memref<1x384xf32, #tpu.memory_space<vmem>>, vector<1x384xf32>
    %208 = vector.broadcast %207 : vector<1x384xf32> to vector<8x384xf32>
    %209 = arith.addf %206, %208 : vector<8x384xf32>
    %210 = vector.extract_strided_slice %209 {offsets = [0, 0], sizes = [8, 256], strides = [1, 1]} : vector<8x384xf32> to vector<8x256xf32>
    %211 = arith.negf %210 : vector<8x256xf32>
    %212 = math.exp %211 : vector<8x256xf32>
    %cst_69 = arith.constant 1.000000e+00 : f32
    %213 = vector.broadcast %cst_69 : f32 to vector<8x256xf32>
    %214 = arith.addf %213, %212 : vector<8x256xf32>
    %215 = arith.divf %213, %214 : vector<8x256xf32>
    %216 = vector.extract_strided_slice %209 {offsets = [0, 256], sizes = [8, 128], strides = [1, 1]} : vector<8x384xf32> to vector<8x128xf32>
    %217 = math.tanh %216 : vector<8x128xf32>
    %218 = vector.extract_strided_slice %215 {offsets = [0, 128], sizes = [8, 128], strides = [1, 1]} : vector<8x256xf32> to vector<8x128xf32>
    %219 = vector.extract_strided_slice %215 {offsets = [0, 0], sizes = [8, 128], strides = [1, 1]} : vector<8x256xf32> to vector<8x128xf32>
    %220 = arith.mulf %219, %217 : vector<8x128xf32>
    %221 = math.tanh %220 : vector<8x128xf32>
    %222 = arith.mulf %218, %221 : vector<8x128xf32>
    %223 = arith.truncf %222 : vector<8x128xf32> to vector<8x128xbf16>
    %c0_70 = arith.constant 0 : index
    %c0_71 = arith.constant 0 : index
    %224 = vector.load %arg9[%c0_70, %c0_71] : memref<128x128xbf16, #tpu.memory_space<vmem>>, vector<128x128xbf16>
    %cst_72 = arith.constant dense<0.000000e+00> : vector<8x128xf32>
    %225 = tpu.matmul %223, %224, %cst_72 {dimension_numbers = #tpu.dot_dimension_numbers<[1], [0], [0], [1], [0, 0, 1, 1], [], []>} : vector<8x128xbf16>, vector<128x128xbf16>, vector<8x128xf32> -> vector<8x128xf32>
    %c0_73 = arith.constant 0 : index
    %c0_74 = arith.constant 0 : index
    %226 = vector.load %arg10[%c0_73, %c0_74] : memref<1x128xf32, #tpu.memory_space<vmem>>, vector<1x128xf32>
    %227 = vector.broadcast %226 : vector<1x128xf32> to vector<8x128xf32>
    %228 = arith.addf %225, %227 : vector<8x128xf32>
    %cst_75 = arith.constant 0.000000e+00 : f32
    %229 = vector.broadcast %cst_75 : f32 to vector<8x128xf32>
    %230 = arith.maximumf %228, %229 : vector<8x128xf32>
    %231 = arith.truncf %230 : vector<8x128xf32> to vector<8x128xbf16>
    %c0_76 = arith.constant 0 : index
    %c0_77 = arith.constant 0 : index
    %232 = vector.load %arg11[%c0_76, %c0_77] : memref<128x128xbf16, #tpu.memory_space<vmem>>, vector<128x128xbf16>
    %cst_78 = arith.constant dense<0.000000e+00> : vector<8x128xf32>
    %233 = tpu.matmul %231, %232, %cst_78 {dimension_numbers = #tpu.dot_dimension_numbers<[1], [0], [0], [1], [0, 0, 1, 1], [], []>} : vector<8x128xbf16>, vector<128x128xbf16>, vector<8x128xf32> -> vector<8x128xf32>
    %c0_79 = arith.constant 0 : index
    %c0_80 = arith.constant 0 : index
    %234 = vector.load %arg12[%c0_79, %c0_80] : memref<1x128xf32, #tpu.memory_space<vmem>>, vector<1x128xf32>
    %235 = vector.broadcast %234 : vector<1x128xf32> to vector<8x128xf32>
    %236 = arith.addf %233, %235 : vector<8x128xf32>
    %c0_81 = arith.constant 0 : index
    %c0_82 = arith.constant 0 : index
    %237 = vector.load %arg13[%c0_81, %c0_82] : memref<8x128xf32, #tpu.memory_space<vmem>>, vector<8x128xf32>
    tpu.vector_store %arg13[%c0_81, %c0_82], %236 {strides = array<i32>} : memref<8x128xf32, #tpu.memory_space<vmem>>, vector<8x128xf32>,
    return
  }
  func.func @transform_0(%arg0: i32) -> (i32, i32, i32) {
    %c0_i32 = arith.constant 0 : i32
    %c0_i32_0 = arith.constant 0 : i32
    %c0_i32_1 = arith.constant 0 : i32
    return %c0_i32, %arg0, %c0_i32_0 : i32, i32, i32
  }
  func.func @transform_1(%arg0: i32) -> (i32, i32) {
    %c0_i32 = arith.constant 0 : i32
    %c0_i32_0 = arith.constant 0 : i32
    %c0_i32_1 = arith.constant 0 : i32
    return %c0_i32, %c0_i32_0 : i32, i32
  }
  func.func @transform_2(%arg0: i32) -> (i32, i32) {
    %c0_i32 = arith.constant 0 : i32
    %c0_i32_0 = arith.constant 0 : i32
    %c0_i32_1 = arith.constant 0 : i32
    return %c0_i32, %c0_i32_0 : i32, i32
  }
  func.func @transform_3(%arg0: i32) -> (i32, i32) {
    %c0_i32 = arith.constant 0 : i32
    %c0_i32_0 = arith.constant 0 : i32
    %c0_i32_1 = arith.constant 0 : i32
    return %c0_i32, %c0_i32_0 : i32, i32
  }
  func.func @transform_4(%arg0: i32) -> (i32, i32) {
    %c0_i32 = arith.constant 0 : i32
    %c0_i32_0 = arith.constant 0 : i32
    %c0_i32_1 = arith.constant 0 : i32
    return %c0_i32, %c0_i32_0 : i32, i32
  }
  func.func @transform_5(%arg0: i32) -> (i32, i32) {
    %c0_i32 = arith.constant 0 : i32
    %c0_i32_0 = arith.constant 0 : i32
    %c0_i32_1 = arith.constant 0 : i32
    return %c0_i32, %c0_i32_0 : i32, i32
  }
  func.func @transform_6(%arg0: i32) -> (i32, i32) {
    %c0_i32 = arith.constant 0 : i32
    %c0_i32_0 = arith.constant 0 : i32
    %c0_i32_1 = arith.constant 0 : i32
    return %c0_i32, %c0_i32_0 : i32, i32
  }
  func.func @transform_7(%arg0: i32) -> (i32, i32) {
    %c0_i32 = arith.constant 0 : i32
    %c0_i32_0 = arith.constant 0 : i32
    %c0_i32_1 = arith.constant 0 : i32
    return %c0_i32, %c0_i32_0 : i32, i32
  }
  func.func @transform_8(%arg0: i32) -> (i32, i32) {
    %c0_i32 = arith.constant 0 : i32
    %c0_i32_0 = arith.constant 0 : i32
    %c0_i32_1 = arith.constant 0 : i32
    return %c0_i32, %c0_i32_0 : i32, i32
  }
  func.func @transform_9(%arg0: i32) -> (i32, i32) {
    %c0_i32 = arith.constant 0 : i32
    %c0_i32_0 = arith.constant 0 : i32
    %c0_i32_1 = arith.constant 0 : i32
    return %c0_i32, %c0_i32_0 : i32, i32
  }
  func.func @transform_10(%arg0: i32) -> (i32, i32) {
    %c0_i32 = arith.constant 0 : i32
    %c0_i32_0 = arith.constant 0 : i32
    %c0_i32_1 = arith.constant 0 : i32
    return %c0_i32, %c0_i32_0 : i32, i32
  }
  func.func @transform_11(%arg0: i32) -> (i32, i32) {
    %c0_i32 = arith.constant 0 : i32
    %c0_i32_0 = arith.constant 0 : i32
    %c0_i32_1 = arith.constant 0 : i32
    return %c0_i32, %c0_i32_0 : i32, i32
  }
  func.func @transform_12(%arg0: i32) -> (i32, i32) {
    %c0_i32 = arith.constant 0 : i32
    %c0_i32_0 = arith.constant 0 : i32
    return %arg0, %c0_i32 : i32, i32
  }
}

</mosaic_0001>

<llo_original>
// kernel: kpnet_forward.1
$region0: #{kpnet_forward.1}
  #allocation0 [shape = 'u32[]', space=smem, size = 0x4, offset = 0x4, fixed_abs, tag = 'smem constant byte address 0x4 - core index']
  #allocation1 [shape = 'u32[144,128]{1,0:T(1,128)}', space=vmem, size = 0x12000, scoped, tag = 'internal scratch']
  #allocation2 [shape = 'f32[8,8,512]{2,1,0:T(8,128)}', space=vmem, size = 0x20000, scoped, tag = 'scratch operand']
  %s0 = inlined_call_operand.vmem [shape: f32[8,8,32], index: 0, kind: input, shape index: {}]
  %s1 = inlined_call_operand.vmem [shape: bf16[32,512], index: 1, kind: input, shape index: {}]
  %s2 = inlined_call_operand.hbm [shape: bf16[128,512], index: 2, kind: input, shape index: {}]
  %s3 = inlined_call_operand.hbm [shape: f32[1,512], index: 3, kind: input, shape index: {}]
  %s4 = inlined_call_operand.vmem [shape: f32[1,128], index: 4, kind: input, shape index: {}]
  %s5 = inlined_call_operand.hbm [shape: f32[1,128], index: 5, kind: input, shape index: {}]
  %s6 = inlined_call_operand.hbm [shape: bf16[128,384], index: 6, kind: input, shape index: {}]
  %s7 = inlined_call_operand.hbm [shape: f32[1,384], index: 7, kind: input, shape index: {}]
  %s8 = inlined_call_operand.hbm [shape: bf16[128,128], index: 8, kind: input, shape index: {}]
  %s9 = inlined_call_operand.hbm [shape: f32[1,128], index: 9, kind: input, shape index: {}]
  %s10 = inlined_call_operand.vmem [shape: bf16[128,128], index: 10, kind: input, shape index: {}]
  %s11 = inlined_call_operand.hbm [shape: f32[1,128], index: 11, kind: input, shape index: {}]
  %s12 = inlined_call_operand.vmem [shape: f32[8,128], index: 12, kind: output, shape index: {}]
  %s13 = sld [smem:[#allocation0]]
  $region90: #{kpnet_forward.1} parent=0
    _
  %s15 = ssub.s32 1, %s13
  %s16 = scalar_select 0, %s15, %s13
  $region1: #{kpnet_forward.1} parent=0
    #allocation3 [shape = 'u8[131072]{0}', space=vmem, size = 0x20000, scoped, tag = 'input window, operand 2, single buffered']
    #allocation4 [shape = 's32[1]{0}', space=sflag, size = 0x4, scoped, tag = 'scoped memory for kpnet_forward.1']
    #allocation5 [shape = 'u8[2048]{0}', space=vmem, size = 0x800, scoped, tag = 'input window, operand 3, single buffered']
    #allocation6 [shape = 's32[1]{0}', space=sflag, size = 0x4, scoped, tag = 'scoped memory for kpnet_forward.1']
    #allocation7 [shape = 'u8[512]{0}', space=vmem, size = 0x400, scoped, tag = 'input window, operand 5, single buffered']
    #allocation8 [shape = 'u8[98304]{0}', space=vmem, size = 0x18000, scoped, tag = 'input window, operand 6, single buffered']
    #allocation9 [shape = 's32[1]{0}', space=sflag, size = 0x4, scoped, tag = 'scoped memory for kpnet_forward.1']
    #allocation10 [shape = 'u8[1536]{0}', space=vmem, size = 0x800, scoped, tag = 'input window, operand 7, single buffered']
    #allocation11 [shape = 'u8[32768]{0}', space=vmem, size = 0x8000, scoped, tag = 'input window, operand 8, single buffered']
    #allocation12 [shape = 's32[1]{0}', space=sflag, size = 0x4, scoped, tag = 'scoped memory for kpnet_forward.1']
    #allocation13 [shape = 'u8[512]{0}', space=vmem, size = 0x400, scoped, tag = 'input window, operand 9, single buffered']
    #allocation14 [shape = 'u8[512]{0}', space=vmem, size = 0x400, scoped, tag = 'input window, operand 11, single buffered']
    #allocation15 [shape = 's32[1]{0}', space=sflag, size = 0x4, scoped, tag = 'scoped memory for kpnet_forward.1']
    %17 = vsyncpa [#allocation4], 0
    %18 = vsyncpa [#allocation6], 0
    %19 = vsyncpa [#allocation9], 0
    %20 = vsyncpa [#allocation12], 0
    %21 = vsyncpa [#allocation15], 0
    // Predicated region
    $region2: #{kpnet_forward.1} parent=1 // pred_check
      _
    $region3: #{kpnet_forward.1} parent=1 // pred_check_branch
      %23 = sbr.rel (0) target = $region5
    $region4: #{kpnet_forward.1} parent=1 // pred_region
      _
    $region5: #{kpnet_forward.1} parent=1 // pred_fallthru
      _
    // Predicated region
    $region6: #{kpnet_forward.1} parent=1 // pred_check
      _
    $region7: #{kpnet_forward.1} parent=1 // pred_check_branch
      %25 = sbr.rel (0) target = $region9
    $region8: #{kpnet_forward.1} parent=1 // pred_region
      _
    $region9: #{kpnet_forward.1} parent=1 // pred_fallthru
      _
    // Predicated region
    $region10: #{kpnet_forward.1} parent=1 // pred_check
      _
    $region11: #{kpnet_forward.1} parent=1 // pred_check_branch
      %27 = sbr.rel (0) target = $region13
    $region12: #{kpnet_forward.1} parent=1 // pred_region
      %s29 = ssub.s32 4096, 4096
      %30 = vsyncadd [#allocation4], %s29
      %s31 = sshll.u32 [#allocation3], 4
      %s32 = int_to_ptr.vmem [resolvable:$true] %s31
      %37 = dma.hbm_to_vmem [thread:$0]  %s2, 4096, %s32, [#allocation4], 256, 256, 16
    $region13: #{kpnet_forward.1} parent=1 // pred_fallthru
      _
    // Predicated region
    $region14: #{kpnet_forward.1} parent=1 // pred_check
      _
    $region15: #{kpnet_forward.1} parent=1 // pred_check_branch
      %39 = sbr.rel (0) target = $region17
    $region16: #{kpnet_forward.1} parent=1 // pred_region
      %s41 = ssub.s32 64, 64
      %42 = vsyncadd [#allocation6], %s41
      %s44 = sshll.u32 [#allocation5], 4
      %s45 = int_to_ptr.vmem [resolvable:$true] %s44
      %47 = dma.hbm_to_vmem [thread:$0]  %s3, 64, %s45, [#allocation6]
    $region17: #{kpnet_forward.1} parent=1 // pred_fallthru
      _
    // Predicated region
    $region18: #{kpnet_forward.1} parent=1 // pred_check
      _
    $region19: #{kpnet_forward.1} parent=1 // pred_check_branch
      %49 = sbr.rel (0) target = $region21
    $region20: #{kpnet_forward.1} parent=1 // pred_region
      _
    $region21: #{kpnet_forward.1} parent=1 // pred_fallthru
      _
    // Predicated region
    $region22: #{kpnet_forward.1} parent=1 // pred_check
      _
    $region23: #{kpnet_forward.1} parent=1 // pred_check_branch
      %51 = sbr.rel (0) target = $region25
    $region24: #{kpnet_forward.1} parent=1 // pred_region
      %s53 = ssub.s32 16, 16
      %54 = vsyncadd [#allocation6], %s53
      %s56 = sshll.u32 [#allocation7], 4
      %s57 = int_to_ptr.vmem [resolvable:$true] %s56
      %59 = dma.hbm_to_vmem [thread:$0]  %s5, 16, %s57, [#allocation6]
    $region25: #{kpnet_forward.1} parent=1 // pred_fallthru
      _
    // Predicated region
    $region26: #{kpnet_forward.1} parent=1 // pred_check
      _
    $region27: #{kpnet_forward.1} parent=1 // pred_check_branch
      %61 = sbr.rel (0) target = $region29
    $region28: #{kpnet_forward.1} parent=1 // pred_region
      %s63 = ssub.s32 3072, 3072
      %64 = vsyncadd [#allocation9], %s63
      %s65 = sshll.u32 [#allocation8], 4
      %s66 = int_to_ptr.vmem [resolvable:$true] %s65
      %71 = dma.hbm_to_vmem [thread:$0]  %s6, 3072, %s66, [#allocation9], 192, 192, 12
    $region29: #{kpnet_forward.1} parent=1 // pred_fallthru
      _
    // Predicated region
    $region30: #{kpnet_forward.1} parent=1 // pred_check
      _
    $region31: #{kpnet_forward.1} parent=1 // pred_check_branch
      %73 = sbr.rel (0) target = $region33
    $region32: #{kpnet_forward.1} parent=1 // pred_region
      %s75 = ssub.s32 48, 48
      %76 = vsyncadd [#allocation9], %s75
      %s78 = sshll.u32 [#allocation10], 4
      %s79 = int_to_ptr.vmem [resolvable:$true] %s78
      %81 = dma.hbm_to_vmem [thread:$0]  %s7, 48, %s79, [#allocation9]
    $region33: #{kpnet_forward.1} parent=1 // pred_fallthru
      _
    // Predicated region
    $region34: #{kpnet_forward.1} parent=1 // pred_check
      _
    $region35: #{kpnet_forward.1} parent=1 // pred_check_branch
      %83 = sbr.rel (0) target = $region37
    $region36: #{kpnet_forward.1} parent=1 // pred_region
      %s85 = ssub.s32 1024, 1024
      %86 = vsyncadd [#allocation12], %s85
      %s87 = sshll.u32 [#allocation11], 4
      %s88 = int_to_ptr.vmem [resolvable:$true] %s87
      %93 = dma.hbm_to_vmem [thread:$0]  %s8, 1024, %s88, [#allocation12], 64, 64, 4
    $region37: #{kpnet_forward.1} parent=1 // pred_fallthru
      _
    // Predicated region
    $region38: #{kpnet_forward.1} parent=1 // pred_check
      _
    $region39: #{kpnet_forward.1} parent=1 // pred_check_branch
      %95 = sbr.rel (0) target = $region41
    $region40: #{kpnet_forward.1} parent=1 // pred_region
      %s97 = ssub.s32 16, 16
      %98 = vsyncadd [#allocation12], %s97
      %s100 = sshll.u32 [#allocation13], 4
      %s101 = int_to_ptr.vmem [resolvable:$true] %s100
      %103 = dma.hbm_to_vmem [thread:$0]  %s9, 16, %s101, [#allocation12]
    $region41: #{kpnet_forward.1} parent=1 // pred_fallthru
      _
    // Predicated region
    $region42: #{kpnet_forward.1} parent=1 // pred_check
      _
    $region43: #{kpnet_forward.1} parent=1 // pred_check_branch
      %105 = sbr.rel (0) target = $region45
    $region44: #{kpnet_forward.1} parent=1 // pred_region
      _
    $region45: #{kpnet_forward.1} parent=1 // pred_fallthru
      _
    // Predicated region
    $region46: #{kpnet_forward.1} parent=1 // pred_check
      _
    $region47: #{kpnet_forward.1} parent=1 // pred_check_branch
      %107 = sbr.rel (0) target = $region49
    $region48: #{kpnet_forward.1} parent=1 // pred_region
      %s109 = ssub.s32 16, 16
      %110 = vsyncadd [#allocation15], %s109
      %s112 = sshll.u32 [#allocation14], 4
      %s113 = int_to_ptr.vmem [resolvable:$true] %s112
      %115 = dma.hbm_to_vmem [thread:$0]  %s11, 16, %s113, [#allocation15]
    $region49: #{kpnet_forward.1} parent=1 // pred_fallthru
      _
    // Predicated region
    $region50: #{kpnet_forward.1} parent=1 // pred_check
      _
    $region51: #{kpnet_forward.1} parent=1 // pred_check_branch
      %117 = sbr.rel (0) target = $region53
    $region52: #{kpnet_forward.1} parent=1 // pred_region
      %118 = dma.done [#allocation4], 4096
    $region53: #{kpnet_forward.1} parent=1 // pred_fallthru
      _
    // Predicated region
    $region54: #{kpnet_forward.1} parent=1 // pred_check
      _
    $region55: #{kpnet_forward.1} parent=1 // pred_check_branch
      %120 = sbr.rel (0) target = $region57
    $region56: #{kpnet_forward.1} parent=1 // pred_region
      %121 = dma.done [#allocation6], 64
    $region57: #{kpnet_forward.1} parent=1 // pred_fallthru
      _
    // Predicated region
    $region58: #{kpnet_forward.1} parent=1 // pred_check
      _
    $region59: #{kpnet_forward.1} parent=1 // pred_check_branch
      %123 = sbr.rel (0) target = $region61
    $region60: #{kpnet_forward.1} parent=1 // pred_region
      %124 = dma.done [#allocation6], 16
    $region61: #{kpnet_forward.1} parent=1 // pred_fallthru
      _
    // Predicated region
    $region62: #{kpnet_forward.1} parent=1 // pred_check
      _
    $region63: #{kpnet_forward.1} parent=1 // pred_check_branch
      %126 = sbr.rel (0) target = $region65
    $region64: #{kpnet_forward.1} parent=1 // pred_region
      %127 = dma.done [#allocation9], 3072
    $region65: #{kpnet_forward.1} parent=1 // pred_fallthru
      _
    // Predicated region
    $region66: #{kpnet_forward.1} parent=1 // pred_check
      _
    $region67: #{kpnet_forward.1} parent=1 // pred_check_branch
      %129 = sbr.rel (0) target = $region69
    $region68: #{kpnet_forward.1} parent=1 // pred_region
      %130 = dma.done [#allocation9], 48
    $region69: #{kpnet_forward.1} parent=1 // pred_fallthru
      _
    // Predicated region
    $region70: #{kpnet_forward.1} parent=1 // pred_check
      _
    $region71: #{kpnet_forward.1} parent=1 // pred_check_branch
      %132 = sbr.rel (0) target = $region73
    $region72: #{kpnet_forward.1} parent=1 // pred_region
      %133 = dma.done [#allocation12], 1024
    $region73: #{kpnet_forward.1} parent=1 // pred_fallthru
      _
    // Predicated region
    $region74: #{kpnet_forward.1} parent=1 // pred_check
      _
    $region75: #{kpnet_forward.1} parent=1 // pred_check_branch
      %135 = sbr.rel (0) target = $region77
    $region76: #{kpnet_forward.1} parent=1 // pred_region
      %136 = dma.done [#allocation12], 16
    $region77: #{kpnet_forward.1} parent=1 // pred_fallthru
      _
    // Predicated region
    $region78: #{kpnet_forward.1} parent=1 // pred_check
      _
    $region79: #{kpnet_forward.1} parent=1 // pred_check_branch
      %138 = sbr.rel (0) target = $region81
    $region80: #{kpnet_forward.1} parent=1 // pred_region
      %139 = dma.done [#allocation15], 16
    $region81: #{kpnet_forward.1} parent=1 // pred_fallthru
      _
    %v141 = vld [vmem:[%s0] sm:$0xff]
    %v142 = vld [vmem:[%s0 + $0x8] sm:$0xff]
    %v143 = vld [vmem:[%s0 + $0x10] sm:$0xff]
    %v144 = vld [vmem:[%s0 + $0x18] sm:$0xff]
    %v145 = vld [vmem:[%s0 + $0x20] sm:$0xff]
    %v146 = vld [vmem:[%s0 + $0x28] sm:$0xff]
    %v147 = vld [vmem:[%s0 + $0x30] sm:$0xff]
    %v148 = vld [vmem:[%s0 + $0x38] sm:$0xff]
    %v149 = vpack.c.bf16 %v142, %v141
    %v150 = vpack.c.bf16 %v144, %v143
    %v151 = vpack.c.bf16 %v146, %v145
    %v152 = vpack.c.bf16 %v148, %v147
    %v153 = vld [vmem:[%s1] sm:$0xff]
    %v154 = vld [vmem:[%s1 + $0x8] sm:$0xff]
    %v155 = vld [vmem:[%s1 + $0x10] sm:$0xff]
    %v156 = vld [vmem:[%s1 + $0x18] sm:$0xff]
    %v157 = vld [vmem:[%s1 + $0x20] sm:$0xff]
    %v158 = vld [vmem:[%s1 + $0x28] sm:$0xff]
    %v159 = vld [vmem:[%s1 + $0x30] sm:$0xff]
    %v160 = vld [vmem:[%s1 + $0x38] sm:$0xff]
    %v161 = vld [vmem:[#allocation5] sm:$0xf]
    %v163 = vlaneseq
    %v164 = vshrl.u32 %v163, 7
    %v165 = vsub.s32 0, %v164
    %v166 = vrot.slane %v161, %v165
    %v167 = vlaneseq
    %v168 = vshrl.u32 %v167, 7
    %v169 = vsub.s32 1, %v168
    %v170 = vrot.slane %v161, %v169
    %v171 = vlaneseq
    %v172 = vshrl.u32 %v171, 7
    %v173 = vsub.s32 2, %v172
    %v174 = vrot.slane %v161, %v173
    %v175 = vlaneseq
    %v176 = vshrl.u32 %v175, 7
    %v177 = vsub.s32 3, %v176
    %v178 = vrot.slane %v161, %v177
    %v191 = vunpack.c.l.b16 %v153
    %v192 = vunpack.c.h.b16 %v153
    %v193 = vunpack.c.l.b16 %v154
    %v194 = vunpack.c.h.b16 %v154
    %v195 = vunpack.c.l.b16 %v155
    %v196 = vunpack.c.h.b16 %v155
    %v197 = vunpack.c.l.b16 %v156
    %v198 = vunpack.c.h.b16 %v156
    %v199 = vunpack.c.l.b16 %v157
    %v200 = vunpack.c.h.b16 %v157
    %v201 = vunpack.c.l.b16 %v158
    %v202 = vunpack.c.h.b16 %v158
    %v203 = vunpack.c.l.b16 %v159
    %v204 = vunpack.c.h.b16 %v159
    %v205 = vunpack.c.l.b16 %v160
    %v206 = vunpack.c.h.b16 %v160
    %v207 = vpack.c.b16 %v195, %v191
    %v208 = vpack.c.b16 %v196, %v192
    %v209 = vpack.c.b16 %v197, %v193
    %v210 = vpack.c.b16 %v198, %v194
    %v211 = vpack.c.b16 %v203, %v199
    %v212 = vpack.c.b16 %v204, %v200
    %v213 = vpack.c.b16 %v205, %v201
    %v214 = vpack.c.b16 %v206, %v202
    %vm223 = vcmask 261120
    %v225 = vsel %vm223, %v149, 0
    %v228 = vsel %vm223, %v150, 0
    %v231 = vsel %vm223, %v151, 0
    %v234 = vsel %vm223, %v152, 0
    %236 = vmatprep.subr.bf16.mxu0 0
    %237 = vmatpush1.bf16.msra.mxu0 0
    %238 = vmatprep.subr.bf16.mxu0 0
    %239 = vmatpush1.bf16.msra.mxu0 0
    %240 = vmatprep.subr.bf16.mxu0 0
    %241 = vmatpush1.bf16.msra.mxu0 0
    %242 = vmatprep.subr.bf16.mxu0 0
    %243 = vmatpush1.bf16.msra.mxu0 0
    %244 = vmatprep.subr.bf16.mxu0 0
    %245 = vmatpush1.bf16.msra.mxu0 0
    %246 = vmatprep.subr.bf16.mxu0 0
    %247 = vmatpush1.bf16.msra.mxu0 0
    %248 = vmatprep.subr.bf16.mxu0 %v212
    %249 = vmatpush1.bf16.msra.mxu0 %v211
    %250 = vmatprep.subr.bf16.mxu0 %v208
    %251 = vmatpush1.bf16.msra.mxu0 %v207
    %252 = vmatprep.subr.bf16.mxu0 0
    %253 = vmatpush2.bf16.msra.mxu0 0
    %254 = vmatprep.subr.bf16.mxu0 0
    %255 = vmatpush2.bf16.msra.mxu0 0
    %256 = vmatprep.subr.bf16.mxu0 0
    %257 = vmatpush2.bf16.msra.mxu0 0
    %258 = vmatprep.subr.bf16.mxu0 0
    %259 = vmatpush2.bf16.msra.mxu0 0
    %260 = vmatprep.subr.bf16.mxu0 0
    %261 = vmatpush2.bf16.msra.mxu0 0
    %262 = vmatprep.subr.bf16.mxu0 0
    %263 = vmatpush2.bf16.msra.mxu0 0
    %264 = vmatprep.subr.bf16.mxu0 0
    %265 = vmatpush2.bf16.msra.mxu0 0
    %266 = vmatprep.subr.bf16.mxu0 0
    %267 = vmatpush2.bf16.msra.mxu0 0
    %268 = vmatprep.mubr.bf16.mxu0 0
    %269 = vmatmul.mubr.bf16.gmra.mxu0 %v225
    %v270 = vpop.f32.mrf.mxu0
    %v271 = vadd.f32 %v166, %v270
    %v272 = vpop.f32.mrf.mxu0
    %v273 = vadd.f32 %v170, %v272
    %v274 = vpop.f32.mrf.mxu0
    %v275 = vadd.f32 %v166, %v274
    %v276 = vpop.f32.mrf.mxu0
    %v277 = vadd.f32 %v170, %v276
    %278 = vmatprep.mubr.bf16.mxu0 0
    %279 = vmatmul.mubr.bf16.gmra.mxu0 %v228
    %v280 = vpop.f32.mrf.mxu0
    %v281 = vadd.f32 %v166, %v280
    %v282 = vpop.f32.mrf.mxu0
    %v283 = vadd.f32 %v170, %v282
    %v284 = vpop.f32.mrf.mxu0
    %v285 = vadd.f32 %v166, %v284
    %v286 = vpop.f32.mrf.mxu0
    %v287 = vadd.f32 %v170, %v286
    %288 = vmatprep.mubr.bf16.mxu0 0
    %289 = vmatmul.mubr.bf16.gmra.mxu0 %v231
    %v290 = vpop.f32.mrf.mxu0
    %v291 = vadd.f32 %v166, %v290
    %v292 = vpop.f32.mrf.mxu0
    %v293 = vadd.f32 %v170, %v292
    %v294 = vpop.f32.mrf.mxu0
    %v295 = vadd.f32 %v166, %v294
    %v296 = vpop.f32.mrf.mxu0
    %v297 = vadd.f32 %v170, %v296
    %298 = vmatprep.mubr.bf16.mxu0 0
    %299 = vmatmul.mubr.bf16.gmra.mxu0 %v234
    %v300 = vpop.f32.mrf.mxu0
    %v301 = vadd.f32 %v166, %v300
    %v302 = vpop.f32.mrf.mxu0
    %v303 = vadd.f32 %v170, %v302
    %v304 = vpop.f32.mrf.mxu0
    %v305 = vadd.f32 %v166, %v304
    %v306 = vpop.f32.mrf.mxu0
    %v307 = vadd.f32 %v170, %v306
    %308 = vdwg.mxu0
    %309 = vmatprep.subr.bf16.mxu0 0
    %310 = vmatpush1.bf16.msra.mxu0 0
    %311 = vmatprep.subr.bf16.mxu0 0
    %312 = vmatpush1.bf16.msra.mxu0 0
    %313 = vmatprep.subr.bf16.mxu0 0
    %314 = vmatpush1.bf16.msra.mxu0 0
    %315 = vmatprep.subr.bf16.mxu0 0
    %316 = vmatpush1.bf16.msra.mxu0 0
    %317 = vmatprep.subr.bf16.mxu0 0
    %318 = vmatpush1.bf16.msra.mxu0 0
    %319 = vmatprep.subr.bf16.mxu0 0
    %320 = vmatpush1.bf16.msra.mxu0 0
    %321 = vmatprep.subr.bf16.mxu0 %v214
    %322 = vmatpush1.bf16.msra.mxu0 %v213
    %323 = vmatprep.subr.bf16.mxu0 %v210
    %324 = vmatpush1.bf16.msra.mxu0 %v209
    %325 = vmatprep.subr.bf16.mxu0 0
    %326 = vmatpush2.bf16.msra.mxu0 0
    %327 = vmatprep.subr.bf16.mxu0 0
    %328 = vmatpush2.bf16.msra.mxu0 0
    %329 = vmatprep.subr.bf16.mxu0 0
    %330 = vmatpush2.bf16.msra.mxu0 0
    %331 = vmatprep.subr.bf16.mxu0 0
    %332 = vmatpush2.bf16.msra.mxu0 0
    %333 = vmatprep.subr.bf16.mxu0 0
    %334 = vmatpush2.bf16.msra.mxu0 0
    %335 = vmatprep.subr.bf16.mxu0 0
    %336 = vmatpush2.bf16.msra.mxu0 0
    %337 = vmatprep.subr.bf16.mxu0 0
    %338 = vmatpush2.bf16.msra.mxu0 0
    %339 = vmatprep.subr.bf16.mxu0 0
    %340 = vmatpush2.bf16.msra.mxu0 0
    %341 = vmatprep.mubr.bf16.mxu0 0
    %342 = vmatmul.mubr.bf16.gmra.mxu0 %v225
    %v343 = vpop.f32.mrf.mxu0
    %v344 = vadd.f32 %v174, %v343
    %v345 = vpop.f32.mrf.mxu0
    %v346 = vadd.f32 %v178, %v345
    %v347 = vpop.f32.mrf.mxu0
    %v348 = vadd.f32 %v174, %v347
    %v349 = vpop.f32.mrf.mxu0
    %v350 = vadd.f32 %v178, %v349
    %351 = vmatprep.mubr.bf16.mxu0 0
    %352 = vmatmul.mubr.bf16.gmra.mxu0 %v228
    %v353 = vpop.f32.mrf.mxu0
    %v354 = vadd.f32 %v174, %v353
    %v355 = vpop.f32.mrf.mxu0
    %v356 = vadd.f32 %v178, %v355
    %v357 = vpop.f32.mrf.mxu0
    %v358 = vadd.f32 %v174, %v357
    %v359 = vpop.f32.mrf.mxu0
    %v360 = vadd.f32 %v178, %v359
    %361 = vmatprep.mubr.bf16.mxu0 0
    %362 = vmatmul.mubr.bf16.gmra.mxu0 %v231
    %v363 = vpop.f32.mrf.mxu0
    %v364 = vadd.f32 %v174, %v363
    %v365 = vpop.f32.mrf.mxu0
    %v366 = vadd.f32 %v178, %v365
    %v367 = vpop.f32.mrf.mxu0
    %v368 = vadd.f32 %v174, %v367
    %v369 = vpop.f32.mrf.mxu0
    %v370 = vadd.f32 %v178, %v369
    %371 = vmatprep.mubr.bf16.mxu0 0
    %372 = vmatmul.mubr.bf16.gmra.mxu0 %v234
    %v373 = vpop.f32.mrf.mxu0
    %v374 = vadd.f32 %v174, %v373
    %v375 = vpop.f32.mrf.mxu0
    %v376 = vadd.f32 %v178, %v375
    %v377 = vpop.f32.mrf.mxu0
    %v378 = vadd.f32 %v174, %v377
    %v379 = vpop.f32.mrf.mxu0
    %v380 = vadd.f32 %v178, %v379
    %381 = vdwg.mxu0
    %382 = vst [vmem:[#allocation2] sm:$0xff] %v271
    %383 = vst [vmem:[#allocation2 + $0x8] sm:$0xff] %v273
    %384 = vst [vmem:[#allocation2 + $0x10] sm:$0xff] %v344
    %385 = vst [vmem:[#allocation2 + $0x18] sm:$0xff] %v346
    %386 = vst [vmem:[#allocation2 + $0x20] sm:$0xff] %v275
    %387 = vst [vmem:[#allocation2 + $0x28] sm:$0xff] %v277
    %388 = vst [vmem:[#allocation2 + $0x30] sm:$0xff] %v348
    %389 = vst [vmem:[#allocation2 + $0x38] sm:$0xff] %v350
    %390 = vst [vmem:[#allocation2 + $0x40] sm:$0xff] %v281
    %391 = vst [vmem:[#allocation2 + $0x48] sm:$0xff] %v283
    %392 = vst [vmem:[#allocation2 + $0x50] sm:$0xff] %v354
    %393 = vst [vmem:[#allocation2 + $0x58] sm:$0xff] %v356
    %394 = vst [vmem:[#allocation2 + $0x60] sm:$0xff] %v285
    %395 = vst [vmem:[#allocation2 + $0x68] sm:$0xff] %v287
    %396 = vst [vmem:[#allocation2 + $0x70] sm:$0xff] %v358
    %397 = vst [vmem:[#allocation2 + $0x78] sm:$0xff] %v360
    %398 = vst [vmem:[#allocation2 + $0x80] sm:$0xff] %v291
    %399 = vst [vmem:[#allocation2 + $0x88] sm:$0xff] %v293
    %400 = vst [vmem:[#allocation2 + $0x90] sm:$0xff] %v364
    %401 = vst [vmem:[#allocation2 + $0x98] sm:$0xff] %v366
    %402 = vst [vmem:[#allocation2 + $0xa0] sm:$0xff] %v295
    %403 = vst [vmem:[#allocation2 + $0xa8] sm:$0xff] %v297
    %404 = vst [vmem:[#allocation2 + $0xb0] sm:$0xff] %v368
    %405 = vst [vmem:[#allocation2 + $0xb8] sm:$0xff] %v370
    %406 = vst [vmem:[#allocation2 + $0xc0] sm:$0xff] %v301
    %407 = vst [vmem:[#allocation2 + $0xc8] sm:$0xff] %v303
    %408 = vst [vmem:[#allocation2 + $0xd0] sm:$0xff] %v374
    %409 = vst [vmem:[#allocation2 + $0xd8] sm:$0xff] %v376
    %410 = vst [vmem:[#allocation2 + $0xe0] sm:$0xff] %v305
    %411 = vst [vmem:[#allocation2 + $0xe8] sm:$0xff] %v307
    %412 = vst [vmem:[#allocation2 + $0xf0] sm:$0xff] %v378
    %413 = vst [vmem:[#allocation2 + $0xf8] sm:$0xff] %v380
    %v414 = vld [vmem:[#allocation2] sm:$0xff]
    %v415 = vld [vmem:[#allocation2 + $0x8] sm:$0xff]
    %v416 = vld [vmem:[#allocation2 + $0x10] sm:$0xff]
    %v417 = vld [vmem:[#allocation2 + $0x18] sm:$0xff]
    %v418 = vld [vmem:[#allocation3] sm:$0xff]
    %v419 = vld [vmem:[#allocation3 + $0x8] sm:$0xff]
    %v420 = vld [vmem:[#allocation3 + $0x10] sm:$0xff]
    %v421 = vld [vmem:[#allocation3 + $0x18] sm:$0xff]
    %v422 = vld [vmem:[#allocation3 + $0x20] sm:$0xff]
    %v423 = vld [vmem:[#allocation3 + $0x28] sm:$0xff]
    %v424 = vld [vmem:[#allocation3 + $0x30] sm:$0xff]
    %v425 = vld [vmem:[#allocation3 + $0x38] sm:$0xff]
    %v426 = vld [vmem:[#allocation3 + $0x40] sm:$0xff]
    %v427 = vld [vmem:[#allocation3 + $0x48] sm:$0xff]
    %v428 = vld [vmem:[#allocation3 + $0x50] sm:$0xff]
    %v429 = vld [vmem:[#allocation3 + $0x58] sm:$0xff]
    %v430 = vld [vmem:[#allocation3 + $0x60] sm:$0xff]
    %v431 = vld [vmem:[#allocation3 + $0x68] sm:$0xff]
    %v432 = vld [vmem:[#allocation3 + $0x70] sm:$0xff]
    %v433 = vld [vmem:[#allocation3 + $0x78] sm:$0xff]
    %v434 = vld [vmem:[#allocation3 + $0x80] sm:$0xff]
    %v435 = vld [vmem:[#allocation3 + $0x88] sm:$0xff]
    %v436 = vld [vmem:[#allocation3 + $0x90] sm:$0xff]
    %v437 = vld [vmem:[#allocation3 + $0x98] sm:$0xff]
    %v438 = vld [vmem:[#allocation3 + $0xa0] sm:$0xff]
    %v439 = vld [vmem:[#allocation3 + $0xa8] sm:$0xff]
    %v440 = vld [vmem:[#allocation3 + $0xb0] sm:$0xff]
    %v441 = vld [vmem:[#allocation3 + $0xb8] sm:$0xff]
    %v442 = vld [vmem:[#allocation3 + $0xc0] sm:$0xff]
    %v443 = vld [vmem:[#allocation3 + $0xc8] sm:$0xff]
    %v444 = vld [vmem:[#allocation3 + $0xd0] sm:$0xff]
    %v445 = vld [vmem:[#allocation3 + $0xd8] sm:$0xff]
    %v446 = vld [vmem:[#allocation3 + $0xe0] sm:$0xff]
    %v447 = vld [vmem:[#allocation3 + $0xe8] sm:$0xff]
    %v448 = vld [vmem:[#allocation3 + $0xf0] sm:$0xff]
    %v449 = vld [vmem:[#allocation3 + $0xf8] sm:$0xff]
    %v482 = vunpack.c.l.b16 %v418
    %v483 = vunpack.c.h.b16 %v418
    %v484 = vunpack.c.l.b16 %v419
    %v485 = vunpack.c.h.b16 %v419
    %v486 = vunpack.c.l.b16 %v420
    %v487 = vunpack.c.h.b16 %v420
    %v488 = vunpack.c.l.b16 %v421
    %v489 = vunpack.c.h.b16 %v421
    %v490 = vunpack.c.l.b16 %v422
    %v491 = vunpack.c.h.b16 %v422
    %v492 = vunpack.c.l.b16 %v423
    %v493 = vunpack.c.h.b16 %v423
    %v494 = vunpack.c.l.b16 %v424
    %v495 = vunpack.c.h.b16 %v424
    %v496 = vunpack.c.l.b16 %v425
    %v497 = vunpack.c.h.b16 %v425
    %v498 = vunpack.c.l.b16 %v426
    %v499 = vunpack.c.h.b16 %v426
    %v500 = vunpack.c.l.b16 %v427
    %v501 = vunpack.c.h.b16 %v427
    %v502 = vunpack.c.l.b16 %v428
    %v503 = vunpack.c.h.b16 %v428
    %v504 = vunpack.c.l.b16 %v429
    %v505 = vunpack.c.h.b16 %v429
    %v506 = vunpack.c.l.b16 %v430
    %v507 = vunpack.c.h.b16 %v430
    %v508 = vunpack.c.l.b16 %v431
    %v509 = vunpack.c.h.b16 %v431
    %v510 = vunpack.c.l.b16 %v432
    %v511 = vunpack.c.h.b16 %v432
    %v512 = vunpack.c.l.b16 %v433
    %v513 = vunpack.c.h.b16 %v433
    %v514 = vunpack.c.l.b16 %v434
    %v515 = vunpack.c.h.b16 %v434
    %v516 = vunpack.c.l.b16 %v435
    %v517 = vunpack.c.h.b16 %v435
    %v518 = vunpack.c.l.b16 %v436
    %v519 = vunpack.c.h.b16 %v436
    %v520 = vunpack.c.l.b16 %v437
    %v521 = vunpack.c.h.b16 %v437
    %v522 = vunpack.c.l.b16 %v438
    %v523 = vunpack.c.h.b16 %v438
    %v524 = vunpack.c.l.b16 %v439
    %v525 = vunpack.c.h.b16 %v439
    %v526 = vunpack.c.l.b16 %v440
    %v527 = vunpack.c.h.b16 %v440
    %v528 = vunpack.c.l.b16 %v441
    %v529 = vunpack.c.h.b16 %v441
    %v530 = vunpack.c.l.b16 %v442
    %v531 = vunpack.c.h.b16 %v442
    %v532 = vunpack.c.l.b16 %v443
    %v533 = vunpack.c.h.b16 %v443
    %v534 = vunpack.c.l.b16 %v444
    %v535 = vunpack.c.h.b16 %v444
    %v536 = vunpack.c.l.b16 %v445
    %v537 = vunpack.c.h.b16 %v445
    %v538 = vunpack.c.l.b16 %v446
    %v539 = vunpack.c.h.b16 %v446
    %v540 = vunpack.c.l.b16 %v447
    %v541 = vunpack.c.h.b16 %v447
    %v542 = vunpack.c.l.b16 %v448
    %v543 = vunpack.c.h.b16 %v448
    %v544 = vunpack.c.l.b16 %v449
    %v545 = vunpack.c.h.b16 %v449
    %v546 = vpack.c.b16 %v486, %v482
    %v547 = vpack.c.b16 %v487, %v483
    %v548 = vpack.c.b16 %v488, %v484
    %v549 = vpack.c.b16 %v489, %v485
    %v550 = vpack.c.b16 %v494, %v490
    %v551 = vpack.c.b16 %v495, %v491
    %v552 = vpack.c.b16 %v496, %v492
    %v553 = vpack.c.b16 %v497, %v493
    %v554 = vpack.c.b16 %v502, %v498
    %v555 = vpack.c.b16 %v503, %v499
    %v556 = vpack.c.b16 %v504, %v500
    %v557 = vpack.c.b16 %v505, %v501
    %v558 = vpack.c.b16 %v510, %v506
    %v559 = vpack.c.b16 %v511, %v507
    %v560 = vpack.c.b16 %v512, %v508
    %v561 = vpack.c.b16 %v513, %v509
    %v562 = vpack.c.b16 %v518, %v514
    %v563 = vpack.c.b16 %v519, %v515
    %v564 = vpack.c.b16 %v520, %v516
    %v565 = vpack.c.b16 %v521, %v517
    %v566 = vpack.c.b16 %v526, %v522
    %v567 = vpack.c.b16 %v527, %v523
    %v568 = vpack.c.b16 %v528, %v524
    %v569 = vpack.c.b16 %v529, %v525
    %v570 = vpack.c.b16 %v534, %v530
    %v571 = vpack.c.b16 %v535, %v531
    %v572 = vpack.c.b16 %v536, %v532
    %v573 = vpack.c.b16 %v537, %v533
    %v574 = vpack.c.b16 %v542, %v538
    %v575 = vpack.c.b16 %v543, %v539
    %v576 = vpack.c.b16 %v544, %v540
    %v577 = vpack.c.b16 %v545, %v541
    %610 = vmatprep.subr.bf16.mxu0 %v575
    %611 = vmatpush1.bf16.msra.mxu0 %v574
    %612 = vmatprep.subr.bf16.mxu0 %v571
    %613 = vmatpush1.bf16.msra.mxu0 %v570
    %614 = vmatprep.subr.bf16.mxu0 %v567
    %615 = vmatpush1.bf16.msra.mxu0 %v566
    %616 = vmatprep.subr.bf16.mxu0 %v563
    %617 = vmatpush1.bf16.msra.mxu0 %v562
    %618 = vmatprep.subr.bf16.mxu0 %v559
    %619 = vmatpush1.bf16.msra.mxu0 %v558
    %620 = vmatprep.subr.bf16.mxu0 %v555
    %621 = vmatpush1.bf16.msra.mxu0 %v554
    %622 = vmatprep.subr.bf16.mxu0 %v551
    %623 = vmatpush1.bf16.msra.mxu0 %v550
    %624 = vmatprep.subr.bf16.mxu0 %v547
    %625 = vmatpush1.bf16.msra.mxu0 %v546
    %626 = vmatprep.subr.bf16.mxu0 0
    %627 = vmatpush2.bf16.msra.mxu0 0
    %628 = vmatprep.subr.bf16.mxu0 0
    %629 = vmatpush2.bf16.msra.mxu0 0
    %630 = vmatprep.subr.bf16.mxu0 0
    %631 = vmatpush2.bf16.msra.mxu0 0
    %632 = vmatprep.subr.bf16.mxu0 0
    %633 = vmatpush2.bf16.msra.mxu0 0
    %634 = vmatprep.subr.bf16.mxu0 0
    %635 = vmatpush2.bf16.msra.mxu0 0
    %636 = vmatprep.subr.bf16.mxu0 0
    %637 = vmatpush2.bf16.msra.mxu0 0
    %638 = vmatprep.subr.bf16.mxu0 0
    %639 = vmatpush2.bf16.msra.mxu0 0
    %640 = vmatprep.subr.bf16.mxu0 0
    %641 = vmatpush2.bf16.msra.mxu0 0
    %642 = vmatprep.mubr.bf16.mxu0 0
    %643 = vmatmul.mubr.bf16.gmra.mxu0 0
    %v644 = vpop.f32.mrf.mxu0
    %v645 = vadd.f32 0.0, %v644
    %v646 = vpop.f32.mrf.mxu0
    %v647 = vadd.f32 0.0, %v646
    %v648 = vpop.f32.mrf.mxu0
    %v649 = vpop.f32.mrf.mxu0
    %650 = vdwg.mxu0
    %651 = vmatprep.subr.bf16.mxu0 %v577
    %652 = vmatpush1.bf16.msra.mxu0 %v576
    %653 = vmatprep.subr.bf16.mxu0 %v573
    %654 = vmatpush1.bf16.msra.mxu0 %v572
    %655 = vmatprep.subr.bf16.mxu0 %v569
    %656 = vmatpush1.bf16.msra.mxu0 %v568
    %657 = vmatprep.subr.bf16.mxu0 %v565
    %658 = vmatpush1.bf16.msra.mxu0 %v564
    %659 = vmatprep.subr.bf16.mxu0 %v561
    %660 = vmatpush1.bf16.msra.mxu0 %v560
    %661 = vmatprep.subr.bf16.mxu0 %v557
    %662 = vmatpush1.bf16.msra.mxu0 %v556
    %663 = vmatprep.subr.bf16.mxu0 %v553
    %664 = vmatpush1.bf16.msra.mxu0 %v552
    %665 = vmatprep.subr.bf16.mxu0 %v549
    %666 = vmatpush1.bf16.msra.mxu0 %v548
    %667 = vmatprep.subr.bf16.mxu0 0
    %668 = vmatpush2.bf16.msra.mxu0 0
    %669 = vmatprep.subr.bf16.mxu0 0
    %670 = vmatpush2.bf16.msra.mxu0 0
    %671 = vmatprep.subr.bf16.mxu0 0
    %672 = vmatpush2.bf16.msra.mxu0 0
    %673 = vmatprep.subr.bf16.mxu0 0
    %674 = vmatpush2.bf16.msra.mxu0 0
    %675 = vmatprep.subr.bf16.mxu0 0
    %676 = vmatpush2.bf16.msra.mxu0 0
    %677 = vmatprep.subr.bf16.mxu0 0
    %678 = vmatpush2.bf16.msra.mxu0 0
    %679 = vmatprep.subr.bf16.mxu0 0
    %680 = vmatpush2.bf16.msra.mxu0 0
    %681 = vmatprep.subr.bf16.mxu0 0
    %682 = vmatpush2.bf16.msra.mxu0 0
    %683 = vmatprep.mubr.bf16.mxu0 0
    %684 = vmatmul.mubr.bf16.gmra.mxu0 0
    %v685 = vpop.f32.mrf.mxu0
    %v686 = vadd.f32 0.0, %v685
    %v687 = vpop.f32.mrf.mxu0
    %v688 = vadd.f32 0.0, %v687
    %v689 = vpop.f32.mrf.mxu0
    %v690 = vpop.f32.mrf.mxu0
    %691 = vdwg.mxu0
    %v692 = vadd.f32 %v414, %v645
    %v693 = vadd.f32 %v415, %v647
    %v694 = vadd.f32 %v416, %v686
    %v695 = vadd.f32 %v417, %v688
    %v696 = vxor.u32 %v692, 2147483648
    %v697 = vxor.u32 %v693, 2147483648
    %v698 = vxor.u32 %v694, 2147483648
    %v699 = vmul.f32 %v696, 1.442695
    %v700 = vpow.pop %v699
    %v701 = vmul.f32 %v697, 1.442695
    %v702 = vpow.pop %v701
    %v703 = vmul.f32 %v698, 1.442695
    %v704 = vpow.pop %v703
    %v705 = vadd.f32 %v700, 1.0
    %v706 = vadd.f32 %v702, 1.0
    %v707 = vadd.f32 %v704, 1.0
    %v708 = vrcp.pop %v705
    %v709 = vmul.f32 1.0, %v708
    %v710 = vrcp.pop %v706
    %v711 = vmul.f32 1.0, %v710
    %v712 = vrcp.pop %v707
    %v713 = vmul.f32 1.0, %v712
    %v714 = vtanh.pop %v695
    %v715 = vmul.f32 %v711, 0.0
    %v716 = vmul.f32 %v709, %v714
    %v717 = vadd.f32 %v715, %v716
    %v718 = vtanh.pop %v717
    %v719 = vmul.f32 %v713, %v718
    %s720 = scalar_lea.vmem [#allocation2], 32
    %v721 = vld [vmem:[%s720] sm:$0xff]
    %v722 = vld [vmem:[%s720 + $0x8] sm:$0xff]
    %v723 = vld [vmem:[%s720 + $0x10] sm:$0xff]
    %v724 = vld [vmem:[%s720 + $0x18] sm:$0xff]
    %v725 = vpack.c.bf16 %v719, %v719
    %726 = vmatprep.subr.bf16.mxu0 %v575
    %727 = vmatpush1.bf16.msra.mxu0 %v574
    %728 = vmatprep.subr.bf16.mxu0 %v571
    %729 = vmatpush1.bf16.msra.mxu0 %v570
    %730 = vmatprep.subr.bf16.mxu0 %v567
    %731 = vmatpush1.bf16.msra.mxu0 %v566
    %732 = vmatprep.subr.bf16.mxu0 %v563
    %733 = vmatpush1.bf16.msra.mxu0 %v562
    %734 = vmatprep.subr.bf16.mxu0 %v559
    %735 = vmatpush1.bf16.msra.mxu0 %v558
    %736 = vmatprep.subr.bf16.mxu0 %v555
    %737 = vmatpush1.bf16.msra.mxu0 %v554
    %738 = vmatprep.subr.bf16.mxu0 %v551
    %739 = vmatpush1.bf16.msra.mxu0 %v550
    %740 = vmatprep.subr.bf16.mxu0 %v547
    %741 = vmatpush1.bf16.msra.mxu0 %v546
    %742 = vmatprep.subr.bf16.mxu0 0
    %743 = vmatpush2.bf16.msra.mxu0 0
    %744 = vmatprep.subr.bf16.mxu0 0
    %745 = vmatpush2.bf16.msra.mxu0 0
    %746 = vmatprep.subr.bf16.mxu0 0
    %747 = vmatpush2.bf16.msra.mxu0 0
    %748 = vmatprep.subr.bf16.mxu0 0
    %749 = vmatpush2.bf16.msra.mxu0 0
    %750 = vmatprep.subr.bf16.mxu0 0
    %751 = vmatpush2.bf16.msra.mxu0 0
    %752 = vmatprep.subr.bf16.mxu0 0
    %753 = vmatpush2.bf16.msra.mxu0 0
    %754 = vmatprep.subr.bf16.mxu0 0
    %755 = vmatpush2.bf16.msra.mxu0 0
    %756 = vmatprep.subr.bf16.mxu0 0
    %757 = vmatpush2.bf16.msra.mxu0 0
    %758 = vmatprep.mubr.bf16.mxu0 0
    %759 = vmatmul.mubr.bf16.gmra.mxu0 %v725
    %v760 = vpop.f32.mrf.mxu0
    %v761 = vadd.f32 0.0, %v760
    %v762 = vpop.f32.mrf.mxu0
    %v763 = vadd.f32 0.0, %v762
    %v764 = vpop.f32.mrf.mxu0
    %v765 = vpop.f32.mrf.mxu0
    %766 = vdwg.mxu0
    %767 = vmatprep.subr.bf16.mxu0 %v577
    %768 = vmatpush1.bf16.msra.mxu0 %v576
    %769 = vmatprep.subr.bf16.mxu0 %v573
    %770 = vmatpush1.bf16.msra.mxu0 %v572
    %771 = vmatprep.subr.bf16.mxu0 %v569
    %772 = vmatpush1.bf16.msra.mxu0 %v568
    %773 = vmatprep.subr.bf16.mxu0 %v565
    %774 = vmatpush1.bf16.msra.mxu0 %v564
    %775 = vmatprep.subr.bf16.mxu0 %v561
    %776 = vmatpush1.bf16.msra.mxu0 %v560
    %777 = vmatprep.subr.bf16.mxu0 %v557
    %778 = vmatpush1.bf16.msra.mxu0 %v556
    %779 = vmatprep.subr.bf16.mxu0 %v553
    %780 = vmatpush1.bf16.msra.mxu0 %v552
    %781 = vmatprep.subr.bf16.mxu0 %v549
    %782 = vmatpush1.bf16.msra.mxu0 %v548
    %783 = vmatprep.subr.bf16.mxu0 0
    %784 = vmatpush2.bf16.msra.mxu0 0
    %785 = vmatprep.subr.bf16.mxu0 0
    %786 = vmatpush2.bf16.msra.mxu0 0
    %787 = vmatprep.subr.bf16.mxu0 0
    %788 = vmatpush2.bf16.msra.mxu0 0
    %789 = vmatprep.subr.bf16.mxu0 0
    %790 = vmatpush2.bf16.msra.mxu0 0
    %791 = vmatprep.subr.bf16.mxu0 0
    %792 = vmatpush2.bf16.msra.mxu0 0
    %793 = vmatprep.subr.bf16.mxu0 0
    %794 = vmatpush2.bf16.msra.mxu0 0
    %795 = vmatprep.subr.bf16.mxu0 0
    %796 = vmatpush2.bf16.msra.mxu0 0
    %797 = vmatprep.subr.bf16.mxu0 0
    %798 = vmatpush2.bf16.msra.mxu0 0
    %799 = vmatprep.mubr.bf16.mxu0 0
    %800 = vmatmul.mubr.bf16.gmra.mxu0 %v725
    %v801 = vpop.f32.mrf.mxu0
    %v802 = vadd.f32 0.0, %v801
    %v803 = vpop.f32.mrf.mxu0
    %v804 = vadd.f32 0.0, %v803
    %v805 = vpop.f32.mrf.mxu0
    %v806 = vpop.f32.mrf.mxu0
    %807 = vdwg.mxu0
    %v808 = vadd.f32 %v721, %v761
    %v809 = vadd.f32 %v722, %v763
    %v810 = vadd.f32 %v723, %v802
    %v811 = vadd.f32 %v724, %v804
    %v812 = vxor.u32 %v808, 2147483648
    %v813 = vxor.u32 %v809, 2147483648
    %v814 = vxor.u32 %v810, 2147483648
    %v815 = vmul.f32 %v812, 1.442695
    %v816 = vpow.pop %v815
    %v817 = vmul.f32 %v813, 1.442695
    %v818 = vpow.pop %v817
    %v819 = vmul.f32 %v814, 1.442695
    %v820 = vpow.pop %v819
    %v821 = vadd.f32 %v816, 1.0
    %v822 = vadd.f32 %v818, 1.0
    %v823 = vadd.f32 %v820, 1.0
    %v824 = vrcp.pop %v821
    %v825 = vmul.f32 1.0, %v824
    %v826 = vrcp.pop %v822
    %v827 = vmul.f32 1.0, %v826
    %v828 = vrcp.pop %v823
    %v829 = vmul.f32 1.0, %v828
    %v830 = vtanh.pop %v811
    %v831 = vmul.f32 %v827, %v717
    %v832 = vmul.f32 %v825, %v830
    %v833 = vadd.f32 %v831, %v832
    %v834 = vtanh.pop %v833
    %v835 = vmul.f32 %v829, %v834
    %s836 = scalar_lea.vmem [#allocation2], 64
    %v837 = vld [vmem:[%s836] sm:$0xff]
    %v838 = vld [vmem:[%s836 + $0x8] sm:$0xff]
    %v839 = vld [vmem:[%s836 + $0x10] sm:$0xff]
    %v840 = vld [vmem:[%s836 + $0x18] sm:$0xff]
    %v841 = vpack.c.bf16 %v835, %v835
    %842 = vmatprep.subr.bf16.mxu0 %v575
    %843 = vmatpush1.bf16.msra.mxu0 %v574
    %844 = vmatprep.subr.bf16.mxu0 %v571
    %845 = vmatpush1.bf16.msra.mxu0 %v570
    %846 = vmatprep.subr.bf16.mxu0 %v567
    %847 = vmatpush1.bf16.msra.mxu0 %v566
    %848 = vmatprep.subr.bf16.mxu0 %v563
    %849 = vmatpush1.bf16.msra.mxu0 %v562
    %850 = vmatprep.subr.bf16.mxu0 %v559
    %851 = vmatpush1.bf16.msra.mxu0 %v558
    %852 = vmatprep.subr.bf16.mxu0 %v555
    %853 = vmatpush1.bf16.msra.mxu0 %v554
    %854 = vmatprep.subr.bf16.mxu0 %v551
    %855 = vmatpush1.bf16.msra.mxu0 %v550
    %856 = vmatprep.subr.bf16.mxu0 %v547
    %857 = vmatpush1.bf16.msra.mxu0 %v546
    %858 = vmatprep.subr.bf16.mxu0 0
    %859 = vmatpush2.bf16.msra.mxu0 0
    %860 = vmatprep.subr.bf16.mxu0 0
    %861 = vmatpush2.bf16.msra.mxu0 0
    %862 = vmatprep.subr.bf16.mxu0 0
    %863 = vmatpush2.bf16.msra.mxu0 0
    %864 = vmatprep.subr.bf16.mxu0 0
    %865 = vmatpush2.bf16.msra.mxu0 0
    %866 = vmatprep.subr.bf16.mxu0 0
    %867 = vmatpush2.bf16.msra.mxu0 0
    %868 = vmatprep.subr.bf16.mxu0 0
    %869 = vmatpush2.bf16.msra.mxu0 0
    %870 = vmatprep.subr.bf16.mxu0 0
    %871 = vmatpush2.bf16.msra.mxu0 0
    %872 = vmatprep.subr.bf16.mxu0 0
    %873 = vmatpush2.bf16.msra.mxu0 0
    %874 = vmatprep.mubr.bf16.mxu0 0
    %875 = vmatmul.mubr.bf16.gmra.mxu0 %v841
    %v876 = vpop.f32.mrf.mxu0
    %v877 = vadd.f32 0.0, %v876
    %v878 = vpop.f32.mrf.mxu0
    %v879 = vadd.f32 0.0, %v878
    %v880 = vpop.f32.mrf.mxu0
    %v881 = vpop.f32.mrf.mxu0
    %882 = vdwg.mxu0
    %883 = vmatprep.subr.bf16.mxu0 %v577
    %884 = vmatpush1.bf16.msra.mxu0 %v576
    %885 = vmatprep.subr.bf16.mxu0 %v573
    %886 = vmatpush1.bf16.msra.mxu0 %v572
    %887 = vmatprep.subr.bf16.mxu0 %v569
    %888 = vmatpush1.bf16.msra.mxu0 %v568
    %889 = vmatprep.subr.bf16.mxu0 %v565
    %890 = vmatpush1.bf16.msra.mxu0 %v564
    %891 = vmatprep.subr.bf16.mxu0 %v561
    %892 = vmatpush1.bf16.msra.mxu0 %v560
    %893 = vmatprep.subr.bf16.mxu0 %v557
    %894 = vmatpush1.bf16.msra.mxu0 %v556
    %895 = vmatprep.subr.bf16.mxu0 %v553
    %896 = vmatpush1.bf16.msra.mxu0 %v552
    %897 = vmatprep.subr.bf16.mxu0 %v549
    %898 = vmatpush1.bf16.msra.mxu0 %v548
    %899 = vmatprep.subr.bf16.mxu0 0
    %900 = vmatpush2.bf16.msra.mxu0 0
    %901 = vmatprep.subr.bf16.mxu0 0
    %902 = vmatpush2.bf16.msra.mxu0 0
    %903 = vmatprep.subr.bf16.mxu0 0
    %904 = vmatpush2.bf16.msra.mxu0 0
    %905 = vmatprep.subr.bf16.mxu0 0
    %906 = vmatpush2.bf16.msra.mxu0 0
    %907 = vmatprep.subr.bf16.mxu0 0
    %908 = vmatpush2.bf16.msra.mxu0 0
    %909 = vmatprep.subr.bf16.mxu0 0
    %910 = vmatpush2.bf16.msra.mxu0 0
    %911 = vmatprep.subr.bf16.mxu0 0
    %912 = vmatpush2.bf16.msra.mxu0 0
    %913 = vmatprep.subr.bf16.mxu0 0
    %914 = vmatpush2.bf16.msra.mxu0 0
    %915 = vmatprep.mubr.bf16.mxu0 0
    %916 = vmatmul.mubr.bf16.gmra.mxu0 %v841
    %v917 = vpop.f32.mrf.mxu0
    %v918 = vadd.f32 0.0, %v917
    %v919 = vpop.f32.mrf.mxu0
    %v920 = vadd.f32 0.0, %v919
    %v921 = vpop.f32.mrf.mxu0
    %v922 = vpop.f32.mrf.mxu0
    %923 = vdwg.mxu0
    %v924 = vadd.f32 %v837, %v877
    %v925 = vadd.f32 %v838, %v879
    %v926 = vadd.f32 %v839, %v918
    %v927 = vadd.f32 %v840, %v920
    %v928 = vxor.u32 %v924, 2147483648
    %v929 = vxor.u32 %v925, 2147483648
    %v930 = vxor.u32 %v926, 2147483648
    %v931 = vmul.f32 %v928, 1.442695
    %v932 = vpow.pop %v931
    %v933 = vmul.f32 %v929, 1.442695
    %v934 = vpow.pop %v933
    %v935 = vmul.f32 %v930, 1.442695
    %v936 = vpow.pop %v935
    %v937 = vadd.f32 %v932, 1.0
    %v938 = vadd.f32 %v934, 1.0
    %v939 = vadd.f32 %v936, 1.0
    %v940 = vrcp.pop %v937
    %v941 = vmul.f32 1.0, %v940
    %v942 = vrcp.pop %v938
    %v943 = vmul.f32 1.0, %v942
    %v944 = vrcp.pop %v939
    %v945 = vmul.f32 1.0, %v944
    %v946 = vtanh.pop %v927
    %v947 = vmul.f32 %v943, %v833
    %v948 = vmul.f32 %v941, %v946
    %v949 = vadd.f32 %v947, %v948
    %v950 = vtanh.pop %v949
    %v951 = vmul.f32 %v945, %v950
    %s952 = scalar_lea.vmem [#allocation2], 96
    %v953 = vld [vmem:[%s952] sm:$0xff]
    %v954 = vld [vmem:[%s952 + $0x8] sm:$0xff]
    %v955 = vld [vmem:[%s952 + $0x10] sm:$0xff]
    %v956 = vld [vmem:[%s952 + $0x18] sm:$0xff]
    %v957 = vpack.c.bf16 %v951, %v951
    %958 = vmatprep.subr.bf16.mxu0 %v575
    %959 = vmatpush1.bf16.msra.mxu0 %v574
    %960 = vmatprep.subr.bf16.mxu0 %v571
    %961 = vmatpush1.bf16.msra.mxu0 %v570
    %962 = vmatprep.subr.bf16.mxu0 %v567
    %963 = vmatpush1.bf16.msra.mxu0 %v566
    %964 = vmatprep.subr.bf16.mxu0 %v563
    %965 = vmatpush1.bf16.msra.mxu0 %v562
    %966 = vmatprep.subr.bf16.mxu0 %v559
    %967 = vmatpush1.bf16.msra.mxu0 %v558
    %968 = vmatprep.subr.bf16.mxu0 %v555
    %969 = vmatpush1.bf16.msra.mxu0 %v554
    %970 = vmatprep.subr.bf16.mxu0 %v551
    %971 = vmatpush1.bf16.msra.mxu0 %v550
    %972 = vmatprep.subr.bf16.mxu0 %v547
    %973 = vmatpush1.bf16.msra.mxu0 %v546
    %974 = vmatprep.subr.bf16.mxu0 0
    %975 = vmatpush2.bf16.msra.mxu0 0
    %976 = vmatprep.subr.bf16.mxu0 0
    %977 = vmatpush2.bf16.msra.mxu0 0
    %978 = vmatprep.subr.bf16.mxu0 0
    %979 = vmatpush2.bf16.msra.mxu0 0
    %980 = vmatprep.subr.bf16.mxu0 0
    %981 = vmatpush2.bf16.msra.mxu0 0
    %982 = vmatprep.subr.bf16.mxu0 0
    %983 = vmatpush2.bf16.msra.mxu0 0
    %984 = vmatprep.subr.bf16.mxu0 0
    %985 = vmatpush2.bf16.msra.mxu0 0
    %986 = vmatprep.subr.bf16.mxu0 0
    %987 = vmatpush2.bf16.msra.mxu0 0
    %988 = vmatprep.subr.bf16.mxu0 0
    %989 = vmatpush2.bf16.msra.mxu0 0
    %990 = vmatprep.mubr.bf16.mxu0 0
    %991 = vmatmul.mubr.bf16.gmra.mxu0 %v957
    %v992 = vpop.f32.mrf.mxu0
    %v993 = vadd.f32 0.0, %v992
    %v994 = vpop.f32.mrf.mxu0
    %v995 = vadd.f32 0.0, %v994
    %v996 = vpop.f32.mrf.mxu0
    %v997 = vpop.f32.mrf.mxu0
    %998 = vdwg.mxu0
    %999 = vmatprep.subr.bf16.mxu0 %v577
    %1000 = vmatpush1.bf16.msra.mxu0 %v576
    %1001 = vmatprep.subr.bf16.mxu0 %v573
    %1002 = vmatpush1.bf16.msra.mxu0 %v572
    %1003 = vmatprep.subr.bf16.mxu0 %v569
    %1004 = vmatpush1.bf16.msra.mxu0 %v568
    %1005 = vmatprep.subr.bf16.mxu0 %v565
    %1006 = vmatpush1.bf16.msra.mxu0 %v564
    %1007 = vmatprep.subr.bf16.mxu0 %v561
    %1008 = vmatpush1.bf16.msra.mxu0 %v560
    %1009 = vmatprep.subr.bf16.mxu0 %v557
    %1010 = vmatpush1.bf16.msra.mxu0 %v556
    %1011 = vmatprep.subr.bf16.mxu0 %v553
    %1012 = vmatpush1.bf16.msra.mxu0 %v552
    %1013 = vmatprep.subr.bf16.mxu0 %v549
    %1014 = vmatpush1.bf16.msra.mxu0 %v548
    %1015 = vmatprep.subr.bf16.mxu0 0
    %1016 = vmatpush2.bf16.msra.mxu0 0
    %1017 = vmatprep.subr.bf16.mxu0 0
    %1018 = vmatpush2.bf16.msra.mxu0 0
    %1019 = vmatprep.subr.bf16.mxu0 0
    %1020 = vmatpush2.bf16.msra.mxu0 0
    %1021 = vmatprep.subr.bf16.mxu0 0
    %1022 = vmatpush2.bf16.msra.mxu0 0
    %1023 = vmatprep.subr.bf16.mxu0 0
    %1024 = vmatpush2.bf16.msra.mxu0 0
    %1025 = vmatprep.subr.bf16.mxu0 0
    %1026 = vmatpush2.bf16.msra.mxu0 0
    %1027 = vmatprep.subr.bf16.mxu0 0
    %1028 = vmatpush2.bf16.msra.mxu0 0
    %1029 = vmatprep.subr.bf16.mxu0 0
    %1030 = vmatpush2.bf16.msra.mxu0 0
    %1031 = vmatprep.mubr.bf16.mxu0 0
    %1032 = vmatmul.mubr.bf16.gmra.mxu0 %v957
    %v1033 = vpop.f32.mrf.mxu0
    %v1034 = vadd.f32 0.0, %v1033
    %v1035 = vpop.f32.mrf.mxu0
    %v1036 = vadd.f32 0.0, %v1035
    %v1037 = vpop.f32.mrf.mxu0
    %v1038 = vpop.f32.mrf.mxu0
    %1039 = vdwg.mxu0
    %v1040 = vadd.f32 %v953, %v993
    %v1041 = vadd.f32 %v954, %v995
    %v1042 = vadd.f32 %v955, %v1034
    %v1043 = vadd.f32 %v956, %v1036
    %v1044 = vxor.u32 %v1040, 2147483648
    %v1045 = vxor.u32 %v1041, 2147483648
    %v1046 = vxor.u32 %v1042, 2147483648
    %v1047 = vmul.f32 %v1044, 1.442695
    %v1048 = vpow.pop %v1047
    %v1049 = vmul.f32 %v1045, 1.442695
    %v1050 = vpow.pop %v1049
    %v1051 = vmul.f32 %v1046, 1.442695
    %v1052 = vpow.pop %v1051
    %v1053 = vadd.f32 %v1048, 1.0
    %v1054 = vadd.f32 %v1050, 1.0
    %v1055 = vadd.f32 %v1052, 1.0
    %v1056 = vrcp.pop %v1053
    %v1057 = vmul.f32 1.0, %v1056
    %v1058 = vrcp.pop %v1054
    %v1059 = vmul.f32 1.0, %v1058
    %v1060 = vrcp.pop %v1055
    %v1061 = vmul.f32 1.0, %v1060
    %v1062 = vtanh.pop %v1043
    %v1063 = vmul.f32 %v1059, %v949
    %v1064 = vmul.f32 %v1057, %v1062
    %v1065 = vadd.f32 %v1063, %v1064
    %v1066 = vtanh.pop %v1065
    %v1067 = vmul.f32 %v1061, %v1066
    %s1068 = scalar_lea.vmem [#allocation2], 128
    %v1069 = vld [vmem:[%s1068] sm:$0xff]
    %v1070 = vld [vmem:[%s1068 + $0x8] sm:$0xff]
    %v1071 = vld [vmem:[%s1068 + $0x10] sm:$0xff]
    %v1072 = vld [vmem:[%s1068 + $0x18] sm:$0xff]
    %v1073 = vpack.c.bf16 %v1067, %v1067
    %1074 = vmatprep.subr.bf16.mxu0 %v575
    %1075 = vmatpush1.bf16.msra.mxu0 %v574
    %1076 = vmatprep.subr.bf16.mxu0 %v571
    %1077 = vmatpush1.bf16.msra.mxu0 %v570
    %1078 = vmatprep.subr.bf16.mxu0 %v567
    %1079 = vmatpush1.bf16.msra.mxu0 %v566
    %1080 = vmatprep.subr.bf16.mxu0 %v563
    %1081 = vmatpush1.bf16.msra.mxu0 %v562
    %1082 = vmatprep.subr.bf16.mxu0 %v559
    %1083 = vmatpush1.bf16.msra.mxu0 %v558
    %1084 = vmatprep.subr.bf16.mxu0 %v555
    %1085 = vmatpush1.bf16.msra.mxu0 %v554
    %1086 = vmatprep.subr.bf16.mxu0 %v551
    %1087 = vmatpush1.bf16.msra.mxu0 %v550
    %1088 = vmatprep.subr.bf16.mxu0 %v547
    %1089 = vmatpush1.bf16.msra.mxu0 %v546
    %1090 = vmatprep.subr.bf16.mxu0 0
    %1091 = vmatpush2.bf16.msra.mxu0 0
    %1092 = vmatprep.subr.bf16.mxu0 0
    %1093 = vmatpush2.bf16.msra.mxu0 0
    %1094 = vmatprep.subr.bf16.mxu0 0
    %1095 = vmatpush2.bf16.msra.mxu0 0
    %1096 = vmatprep.subr.bf16.mxu0 0
    %1097 = vmatpush2.bf16.msra.mxu0 0
    %1098 = vmatprep.subr.bf16.mxu0 0
    %1099 = vmatpush2.bf16.msra.mxu0 0
    %1100 = vmatprep.subr.bf16.mxu0 0
    %1101 = vmatpush2.bf16.msra.mxu0 0
    %1102 = vmatprep.subr.bf16.mxu0 0
    %1103 = vmatpush2.bf16.msra.mxu0 0
    %1104 = vmatprep.subr.bf16.mxu0 0
    %1105 = vmatpush2.bf16.msra.mxu0 0
    %1106 = vmatprep.mubr.bf16.mxu0 0
    %1107 = vmatmul.mubr.bf16.gmra.mxu0 %v1073
    %v1108 = vpop.f32.mrf.mxu0
    %v1109 = vadd.f32 0.0, %v1108
    %v1110 = vpop.f32.mrf.mxu0
    %v1111 = vadd.f32 0.0, %v1110
    %v1112 = vpop.f32.mrf.mxu0
    %v1113 = vpop.f32.mrf.mxu0
    %1114 = vdwg.mxu0
    %1115 = vmatprep.subr.bf16.mxu0 %v577
    %1116 = vmatpush1.bf16.msra.mxu0 %v576
    %1117 = vmatprep.subr.bf16.mxu0 %v573
    %1118 = vmatpush1.bf16.msra.mxu0 %v572
    %1119 = vmatprep.subr.bf16.mxu0 %v569
    %1120 = vmatpush1.bf16.msra.mxu0 %v568
    %1121 = vmatprep.subr.bf16.mxu0 %v565
    %1122 = vmatpush1.bf16.msra.mxu0 %v564
    %1123 = vmatprep.subr.bf16.mxu0 %v561
    %1124 = vmatpush1.bf16.msra.mxu0 %v560
    %1125 = vmatprep.subr.bf16.mxu0 %v557
    %1126 = vmatpush1.bf16.msra.mxu0 %v556
    %1127 = vmatprep.subr.bf16.mxu0 %v553
    %1128 = vmatpush1.bf16.msra.mxu0 %v552
    %1129 = vmatprep.subr.bf16.mxu0 %v549
    %1130 = vmatpush1.bf16.msra.mxu0 %v548
    %1131 = vmatprep.subr.bf16.mxu0 0
    %1132 = vmatpush2.bf16.msra.mxu0 0
    %1133 = vmatprep.subr.bf16.mxu0 0
    %1134 = vmatpush2.bf16.msra.mxu0 0
    %1135 = vmatprep.subr.bf16.mxu0 0
    %1136 = vmatpush2.bf16.msra.mxu0 0
    %1137 = vmatprep.subr.bf16.mxu0 0
    %1138 = vmatpush2.bf16.msra.mxu0 0
    %1139 = vmatprep.subr.bf16.mxu0 0
    %1140 = vmatpush2.bf16.msra.mxu0 0
    %1141 = vmatprep.subr.bf16.mxu0 0
    %1142 = vmatpush2.bf16.msra.mxu0 0
    %1143 = vmatprep.subr.bf16.mxu0 0
    %1144 = vmatpush2.bf16.msra.mxu0 0
    %1145 = vmatprep.subr.bf16.mxu0 0
    %1146 = vmatpush2.bf16.msra.mxu0 0
    %1147 = vmatprep.mubr.bf16.mxu0 0
    %1148 = vmatmul.mubr.bf16.gmra.mxu0 %v1073
    %v1149 = vpop.f32.mrf.mxu0
    %v1150 = vadd.f32 0.0, %v1149
    %v1151 = vpop.f32.mrf.mxu0
    %v1152 = vadd.f32 0.0, %v1151
    %v1153 = vpop.f32.mrf.mxu0
    %v1154 = vpop.f32.mrf.mxu0
    %1155 = vdwg.mxu0
    %v1156 = vadd.f32 %v1069, %v1109
    %v1157 = vadd.f32 %v1070, %v1111
    %v1158 = vadd.f32 %v1071, %v1150
    %v1159 = vadd.f32 %v1072, %v1152
    %v1160 = vxor.u32 %v1156, 2147483648
    %v1161 = vxor.u32 %v1157, 2147483648
    %v1162 = vxor.u32 %v1158, 2147483648
    %v1163 = vmul.f32 %v1160, 1.442695
    %v1164 = vpow.pop %v1163
    %v1165 = vmul.f32 %v1161, 1.442695
    %v1166 = vpow.pop %v1165
    %v1167 = vmul.f32 %v1162, 1.442695
    %v1168 = vpow.pop %v1167
    %v1169 = vadd.f32 %v1164, 1.0
    %v1170 = vadd.f32 %v1166, 1.0
    %v1171 = vadd.f32 %v1168, 1.0
    %v1172 = vrcp.pop %v1169
    %v1173 = vmul.f32 1.0, %v1172
    %v1174 = vrcp.pop %v1170
    %v1175 = vmul.f32 1.0, %v1174
    %v1176 = vrcp.pop %v1171
    %v1177 = vmul.f32 1.0, %v1176
    %v1178 = vtanh.pop %v1159
    %v1179 = vmul.f32 %v1175, %v1065
    %v1180 = vmul.f32 %v1173, %v1178
    %v1181 = vadd.f32 %v1179, %v1180
    %v1182 = vtanh.pop %v1181
    %v1183 = vmul.f32 %v1177, %v1182
    %s1184 = scalar_lea.vmem [#allocation2], 160
    %v1185 = vld [vmem:[%s1184] sm:$0xff]
    %v1186 = vld [vmem:[%s1184 + $0x8] sm:$0xff]
    %v1187 = vld [vmem:[%s1184 + $0x10] sm:$0xff]
    %v1188 = vld [vmem:[%s1184 + $0x18] sm:$0xff]
    %v1189 = vpack.c.bf16 %v1183, %v1183
    %1190 = vmatprep.subr.bf16.mxu0 %v575
    %1191 = vmatpush1.bf16.msra.mxu0 %v574
    %1192 = vmatprep.subr.bf16.mxu0 %v571
    %1193 = vmatpush1.bf16.msra.mxu0 %v570
    %1194 = vmatprep.subr.bf16.mxu0 %v567
    %1195 = vmatpush1.bf16.msra.mxu0 %v566
    %1196 = vmatprep.subr.bf16.mxu0 %v563
    %1197 = vmatpush1.bf16.msra.mxu0 %v562
    %1198 = vmatprep.subr.bf16.mxu0 %v559
    %1199 = vmatpush1.bf16.msra.mxu0 %v558
    %1200 = vmatprep.subr.bf16.mxu0 %v555
    %1201 = vmatpush1.bf16.msra.mxu0 %v554
    %1202 = vmatprep.subr.bf16.mxu0 %v551
    %1203 = vmatpush1.bf16.msra.mxu0 %v550
    %1204 = vmatprep.subr.bf16.mxu0 %v547
    %1205 = vmatpush1.bf16.msra.mxu0 %v546
    %1206 = vmatprep.subr.bf16.mxu0 0
    %1207 = vmatpush2.bf16.msra.mxu0 0
    %1208 = vmatprep.subr.bf16.mxu0 0
    %1209 = vmatpush2.bf16.msra.mxu0 0
    %1210 = vmatprep.subr.bf16.mxu0 0
    %1211 = vmatpush2.bf16.msra.mxu0 0
    %1212 = vmatprep.subr.bf16.mxu0 0
    %1213 = vmatpush2.bf16.msra.mxu0 0
    %1214 = vmatprep.subr.bf16.mxu0 0
    %1215 = vmatpush2.bf16.msra.mxu0 0
    %1216 = vmatprep.subr.bf16.mxu0 0
    %1217 = vmatpush2.bf16.msra.mxu0 0
    %1218 = vmatprep.subr.bf16.mxu0 0
    %1219 = vmatpush2.bf16.msra.mxu0 0
    %1220 = vmatprep.subr.bf16.mxu0 0
    %1221 = vmatpush2.bf16.msra.mxu0 0
    %1222 = vmatprep.mubr.bf16.mxu0 0
    %1223 = vmatmul.mubr.bf16.gmra.mxu0 %v1189
    %v1224 = vpop.f32.mrf.mxu0
    %v1225 = vadd.f32 0.0, %v1224
    %v1226 = vpop.f32.mrf.mxu0
    %v1227 = vadd.f32 0.0, %v1226
    %v1228 = vpop.f32.mrf.mxu0
    %v1229 = vpop.f32.mrf.mxu0
    %1230 = vdwg.mxu0
    %1231 = vmatprep.subr.bf16.mxu0 %v577
    %1232 = vmatpush1.bf16.msra.mxu0 %v576
    %1233 = vmatprep.subr.bf16.mxu0 %v573
    %1234 = vmatpush1.bf16.msra.mxu0 %v572
    %1235 = vmatprep.subr.bf16.mxu0 %v569
    %1236 = vmatpush1.bf16.msra.mxu0 %v568
    %1237 = vmatprep.subr.bf16.mxu0 %v565
    %1238 = vmatpush1.bf16.msra.mxu0 %v564
    %1239 = vmatprep.subr.bf16.mxu0 %v561
    %1240 = vmatpush1.bf16.msra.mxu0 %v560
    %1241 = vmatprep.subr.bf16.mxu0 %v557
    %1242 = vmatpush1.bf16.msra.mxu0 %v556
    %1243 = vmatprep.subr.bf16.mxu0 %v553
    %1244 = vmatpush1.bf16.msra.mxu0 %v552
    %1245 = vmatprep.subr.bf16.mxu0 %v549
    %1246 = vmatpush1.bf16.msra.mxu0 %v548
    %1247 = vmatprep.subr.bf16.mxu0 0
    %1248 = vmatpush2.bf16.msra.mxu0 0
    %1249 = vmatprep.subr.bf16.mxu0 0
    %1250 = vmatpush2.bf16.msra.mxu0 0
    %1251 = vmatprep.subr.bf16.mxu0 0
    %1252 = vmatpush2.bf16.msra.mxu0 0
    %1253 = vmatprep.subr.bf16.mxu0 0
    %1254 = vmatpush2.bf16.msra.mxu0 0
    %1255 = vmatprep.subr.bf16.mxu0 0
    %1256 = vmatpush2.bf16.msra.mxu0 0
    %1257 = vmatprep.subr.bf16.mxu0 0
    %1258 = vmatpush2.bf16.msra.mxu0 0
    %1259 = vmatprep.subr.bf16.mxu0 0
    %1260 = vmatpush2.bf16.msra.mxu0 0
    %1261 = vmatprep.subr.bf16.mxu0 0
    %1262 = vmatpush2.bf16.msra.mxu0 0
    %1263 = vmatprep.mubr.bf16.mxu0 0
    %1264 = vmatmul.mubr.bf16.gmra.mxu0 %v1189
    %v1265 = vpop.f32.mrf.mxu0
    %v1266 = vadd.f32 0.0, %v1265
    %v1267 = vpop.f32.mrf.mxu0
    %v1268 = vadd.f32 0.0, %v1267
    %v1269 = vpop.f32.mrf.mxu0
    %v1270 = vpop.f32.mrf.mxu0
    %1271 = vdwg.mxu0
    %v1272 = vadd.f32 %v1185, %v1225
    %v1273 = vadd.f32 %v1186, %v1227
    %v1274 = vadd.f32 %v1187, %v1266
    %v1275 = vadd.f32 %v1188, %v1268
    %v1276 = vxor.u32 %v1272, 2147483648
    %v1277 = vxor.u32 %v1273, 2147483648
    %v1278 = vxor.u32 %v1274, 2147483648
    %v1279 = vmul.f32 %v1276, 1.442695
    %v1280 = vpow.pop %v1279
    %v1281 = vmul.f32 %v1277, 1.442695
    %v1282 = vpow.pop %v1281
    %v1283 = vmul.f32 %v1278, 1.442695
    %v1284 = vpow.pop %v1283
    %v1285 = vadd.f32 %v1280, 1.0
    %v1286 = vadd.f32 %v1282, 1.0
    %v1287 = vadd.f32 %v1284, 1.0
    %v1288 = vrcp.pop %v1285
    %v1289 = vmul.f32 1.0, %v1288
    %v1290 = vrcp.pop %v1286
    %v1291 = vmul.f32 1.0, %v1290
    %v1292 = vrcp.pop %v1287
    %v1293 = vmul.f32 1.0, %v1292
    %v1294 = vtanh.pop %v1275
    %v1295 = vmul.f32 %v1291, %v1181
    %v1296 = vmul.f32 %v1289, %v1294
    %v1297 = vadd.f32 %v1295, %v1296
    %v1298 = vtanh.pop %v1297
    %v1299 = vmul.f32 %v1293, %v1298
    %s1300 = scalar_lea.vmem [#allocation2], 192
    %v1301 = vld [vmem:[%s1300] sm:$0xff]
    %v1302 = vld [vmem:[%s1300 + $0x8] sm:$0xff]
    %v1303 = vld [vmem:[%s1300 + $0x10] sm:$0xff]
    %v1304 = vld [vmem:[%s1300 + $0x18] sm:$0xff]
    %v1305 = vpack.c.bf16 %v1299, %v1299
    %1306 = vmatprep.subr.bf16.mxu0 %v575
    %1307 = vmatpush1.bf16.msra.mxu0 %v574
    %1308 = vmatprep.subr.bf16.mxu0 %v571
    %1309 = vmatpush1.bf16.msra.mxu0 %v570
    %1310 = vmatprep.subr.bf16.mxu0 %v567
    %1311 = vmatpush1.bf16.msra.mxu0 %v566
    %1312 = vmatprep.subr.bf16.mxu0 %v563
    %1313 = vmatpush1.bf16.msra.mxu0 %v562
    %1314 = vmatprep.subr.bf16.mxu0 %v559
    %1315 = vmatpush1.bf16.msra.mxu0 %v558
    %1316 = vmatprep.subr.bf16.mxu0 %v555
    %1317 = vmatpush1.bf16.msra.mxu0 %v554
    %1318 = vmatprep.subr.bf16.mxu0 %v551
    %1319 = vmatpush1.bf16.msra.mxu0 %v550
    %1320 = vmatprep.subr.bf16.mxu0 %v547
    %1321 = vmatpush1.bf16.msra.mxu0 %v546
    %1322 = vmatprep.subr.bf16.mxu0 0
    %1323 = vmatpush2.bf16.msra.mxu0 0
    %1324 = vmatprep.subr.bf16.mxu0 0
    %1325 = vmatpush2.bf16.msra.mxu0 0
    %1326 = vmatprep.subr.bf16.mxu0 0
    %1327 = vmatpush2.bf16.msra.mxu0 0
    %1328 = vmatprep.subr.bf16.mxu0 0
    %1329 = vmatpush2.bf16.msra.mxu0 0
    %1330 = vmatprep.subr.bf16.mxu0 0
    %1331 = vmatpush2.bf16.msra.mxu0 0
    %1332 = vmatprep.subr.bf16.mxu0 0
    %1333 = vmatpush2.bf16.msra.mxu0 0
    %1334 = vmatprep.subr.bf16.mxu0 0
    %1335 = vmatpush2.bf16.msra.mxu0 0
    %1336 = vmatprep.subr.bf16.mxu0 0
    %1337 = vmatpush2.bf16.msra.mxu0 0
    %1338 = vmatprep.mubr.bf16.mxu0 0
    %1339 = vmatmul.mubr.bf16.gmra.mxu0 %v1305
    %v1340 = vpop.f32.mrf.mxu0
    %v1341 = vadd.f32 0.0, %v1340
    %v1342 = vpop.f32.mrf.mxu0
    %v1343 = vadd.f32 0.0, %v1342
    %v1344 = vpop.f32.mrf.mxu0
    %v1345 = vpop.f32.mrf.mxu0
    %1346 = vdwg.mxu0
    %1347 = vmatprep.subr.bf16.mxu0 %v577
    %1348 = vmatpush1.bf16.msra.mxu0 %v576
    %1349 = vmatprep.subr.bf16.mxu0 %v573
    %1350 = vmatpush1.bf16.msra.mxu0 %v572
    %1351 = vmatprep.subr.bf16.mxu0 %v569
    %1352 = vmatpush1.bf16.msra.mxu0 %v568
    %1353 = vmatprep.subr.bf16.mxu0 %v565
    %1354 = vmatpush1.bf16.msra.mxu0 %v564
    %1355 = vmatprep.subr.bf16.mxu0 %v561
    %1356 = vmatpush1.bf16.msra.mxu0 %v560
    %1357 = vmatprep.subr.bf16.mxu0 %v557
    %1358 = vmatpush1.bf16.msra.mxu0 %v556
    %1359 = vmatprep.subr.bf16.mxu0 %v553
    %1360 = vmatpush1.bf16.msra.mxu0 %v552
    %1361 = vmatprep.subr.bf16.mxu0 %v549
    %1362 = vmatpush1.bf16.msra.mxu0 %v548
    %1363 = vmatprep.subr.bf16.mxu0 0
    %1364 = vmatpush2.bf16.msra.mxu0 0
    %1365 = vmatprep.subr.bf16.mxu0 0
    %1366 = vmatpush2.bf16.msra.mxu0 0
    %1367 = vmatprep.subr.bf16.mxu0 0
    %1368 = vmatpush2.bf16.msra.mxu0 0
    %1369 = vmatprep.subr.bf16.mxu0 0
    %1370 = vmatpush2.bf16.msra.mxu0 0
    %1371 = vmatprep.subr.bf16.mxu0 0
    %1372 = vmatpush2.bf16.msra.mxu0 0
    %1373 = vmatprep.subr.bf16.mxu0 0
    %1374 = vmatpush2.bf16.msra.mxu0 0
    %1375 = vmatprep.subr.bf16.mxu0 0
    %1376 = vmatpush2.bf16.msra.mxu0 0
    %1377 = vmatprep.subr.bf16.mxu0 0
    %1378 = vmatpush2.bf16.msra.mxu0 0
    %1379 = vmatprep.mubr.bf16.mxu0 0
    %1380 = vmatmul.mubr.bf16.gmra.mxu0 %v1305
    %v1381 = vpop.f32.mrf.mxu0
    %v1382 = vadd.f32 0.0, %v1381
    %v1383 = vpop.f32.mrf.mxu0
    %v1384 = vadd.f32 0.0, %v1383
    %v1385 = vpop.f32.mrf.mxu0
    %v1386 = vpop.f32.mrf.mxu0
    %1387 = vdwg.mxu0
    %v1388 = vadd.f32 %v1301, %v1341
    %v1389 = vadd.f32 %v1302, %v1343
    %v1390 = vadd.f32 %v1303, %v1382
    %v1391 = vadd.f32 %v1304, %v1384
    %v1392 = vxor.u32 %v1388, 2147483648
    %v1393 = vxor.u32 %v1389, 2147483648
    %v1394 = vxor.u32 %v1390, 2147483648
    %v1395 = vmul.f32 %v1392, 1.442695
    %v1396 = vpow.pop %v1395
    %v1397 = vmul.f32 %v1393, 1.442695
    %v1398 = vpow.pop %v1397
    %v1399 = vmul.f32 %v1394, 1.442695
    %v1400 = vpow.pop %v1399
    %v1401 = vadd.f32 %v1396, 1.0
    %v1402 = vadd.f32 %v1398, 1.0
    %v1403 = vadd.f32 %v1400, 1.0
    %v1404 = vrcp.pop %v1401
    %v1405 = vmul.f32 1.0, %v1404
    %v1406 = vrcp.pop %v1402
    %v1407 = vmul.f32 1.0, %v1406
    %v1408 = vrcp.pop %v1403
    %v1409 = vmul.f32 1.0, %v1408
    %v1410 = vtanh.pop %v1391
    %v1411 = vmul.f32 %v1407, %v1297
    %v1412 = vmul.f32 %v1405, %v1410
    %v1413 = vadd.f32 %v1411, %v1412
    %v1414 = vtanh.pop %v1413
    %v1415 = vmul.f32 %v1409, %v1414
    %s1416 = scalar_lea.vmem [#allocation2], 224
    %v1417 = vld [vmem:[%s1416] sm:$0xff]
    %v1418 = vld [vmem:[%s1416 + $0x8] sm:$0xff]
    %v1419 = vld [vmem:[%s1416 + $0x10] sm:$0xff]
    %v1420 = vld [vmem:[%s1416 + $0x18] sm:$0xff]
    %v1421 = vpack.c.bf16 %v1415, %v1415
    %1422 = vmatprep.subr.bf16.mxu0 %v575
    %1423 = vmatpush1.bf16.msra.mxu0 %v574
    %1424 = vmatprep.subr.bf16.mxu0 %v571
    %1425 = vmatpush1.bf16.msra.mxu0 %v570
    %1426 = vmatprep.subr.bf16.mxu0 %v567
    %1427 = vmatpush1.bf16.msra.mxu0 %v566
    %1428 = vmatprep.subr.bf16.mxu0 %v563
    %1429 = vmatpush1.bf16.msra.mxu0 %v562
    %1430 = vmatprep.subr.bf16.mxu0 %v559
    %1431 = vmatpush1.bf16.msra.mxu0 %v558
    %1432 = vmatprep.subr.bf16.mxu0 %v555
    %1433 = vmatpush1.bf16.msra.mxu0 %v554
    %1434 = vmatprep.subr.bf16.mxu0 %v551
    %1435 = vmatpush1.bf16.msra.mxu0 %v550
    %1436 = vmatprep.subr.bf16.mxu0 %v547
    %1437 = vmatpush1.bf16.msra.mxu0 %v546
    %1438 = vmatprep.subr.bf16.mxu0 0
    %1439 = vmatpush2.bf16.msra.mxu0 0
    %1440 = vmatprep.subr.bf16.mxu0 0
    %1441 = vmatpush2.bf16.msra.mxu0 0
    %1442 = vmatprep.subr.bf16.mxu0 0
    %1443 = vmatpush2.bf16.msra.mxu0 0
    %1444 = vmatprep.subr.bf16.mxu0 0
    %1445 = vmatpush2.bf16.msra.mxu0 0
    %1446 = vmatprep.subr.bf16.mxu0 0
    %1447 = vmatpush2.bf16.msra.mxu0 0
    %1448 = vmatprep.subr.bf16.mxu0 0
    %1449 = vmatpush2.bf16.msra.mxu0 0
    %1450 = vmatprep.subr.bf16.mxu0 0
    %1451 = vmatpush2.bf16.msra.mxu0 0
    %1452 = vmatprep.subr.bf16.mxu0 0
    %1453 = vmatpush2.bf16.msra.mxu0 0
    %1454 = vmatprep.mubr.bf16.mxu0 0
    %1455 = vmatmul.mubr.bf16.gmra.mxu0 %v1421
    %v1456 = vpop.f32.mrf.mxu0
    %v1457 = vadd.f32 0.0, %v1456
    %v1458 = vpop.f32.mrf.mxu0
    %v1459 = vadd.f32 0.0, %v1458
    %v1460 = vpop.f32.mrf.mxu0
    %v1461 = vpop.f32.mrf.mxu0
    %1462 = vdwg.mxu0
    %1463 = vmatprep.subr.bf16.mxu0 %v577
    %1464 = vmatpush1.bf16.msra.mxu0 %v576
    %1465 = vmatprep.subr.bf16.mxu0 %v573
    %1466 = vmatpush1.bf16.msra.mxu0 %v572
    %1467 = vmatprep.subr.bf16.mxu0 %v569
    %1468 = vmatpush1.bf16.msra.mxu0 %v568
    %1469 = vmatprep.subr.bf16.mxu0 %v565
    %1470 = vmatpush1.bf16.msra.mxu0 %v564
    %1471 = vmatprep.subr.bf16.mxu0 %v561
    %1472 = vmatpush1.bf16.msra.mxu0 %v560
    %1473 = vmatprep.subr.bf16.mxu0 %v557
    %1474 = vmatpush1.bf16.msra.mxu0 %v556
    %1475 = vmatprep.subr.bf16.mxu0 %v553
    %1476 = vmatpush1.bf16.msra.mxu0 %v552
    %1477 = vmatprep.subr.bf16.mxu0 %v549
    %1478 = vmatpush1.bf16.msra.mxu0 %v548
    %1479 = vmatprep.subr.bf16.mxu0 0
    %1480 = vmatpush2.bf16.msra.mxu0 0
    %1481 = vmatprep.subr.bf16.mxu0 0
    %1482 = vmatpush2.bf16.msra.mxu0 0
    %1483 = vmatprep.subr.bf16.mxu0 0
    %1484 = vmatpush2.bf16.msra.mxu0 0
    %1485 = vmatprep.subr.bf16.mxu0 0
    %1486 = vmatpush2.bf16.msra.mxu0 0
    %1487 = vmatprep.subr.bf16.mxu0 0
    %1488 = vmatpush2.bf16.msra.mxu0 0
    %1489 = vmatprep.subr.bf16.mxu0 0
    %1490 = vmatpush2.bf16.msra.mxu0 0
    %1491 = vmatprep.subr.bf16.mxu0 0
    %1492 = vmatpush2.bf16.msra.mxu0 0
    %1493 = vmatprep.subr.bf16.mxu0 0
    %1494 = vmatpush2.bf16.msra.mxu0 0
    %1495 = vmatprep.mubr.bf16.mxu0 0
    %1496 = vmatmul.mubr.bf16.gmra.mxu0 %v1421
    %v1497 = vpop.f32.mrf.mxu0
    %v1498 = vadd.f32 0.0, %v1497
    %v1499 = vpop.f32.mrf.mxu0
    %v1500 = vadd.f32 0.0, %v1499
    %v1501 = vpop.f32.mrf.mxu0
    %v1502 = vpop.f32.mrf.mxu0
    %1503 = vdwg.mxu0
    %v1504 = vadd.f32 %v1417, %v1457
    %v1505 = vadd.f32 %v1418, %v1459
    %v1506 = vadd.f32 %v1419, %v1498
    %v1507 = vadd.f32 %v1420, %v1500
    %v1508 = vxor.u32 %v1504, 2147483648
    %v1509 = vxor.u32 %v1505, 2147483648
    %v1510 = vxor.u32 %v1506, 2147483648
    %v1511 = vmul.f32 %v1508, 1.442695
    %v1512 = vpow.pop %v1511
    %v1513 = vmul.f32 %v1509, 1.442695
    %v1514 = vpow.pop %v1513
    %v1515 = vmul.f32 %v1510, 1.442695
    %v1516 = vpow.pop %v1515
    %v1517 = vadd.f32 %v1512, 1.0
    %v1518 = vadd.f32 %v1514, 1.0
    %v1519 = vadd.f32 %v1516, 1.0
    %v1520 = vrcp.pop %v1517
    %v1521 = vmul.f32 1.0, %v1520
    %v1522 = vrcp.pop %v1518
    %v1523 = vmul.f32 1.0, %v1522
    %v1524 = vrcp.pop %v1519
    %v1525 = vmul.f32 1.0, %v1524
    %v1526 = vtanh.pop %v1507
    %v1527 = vmul.f32 %v1523, %v1413
    %v1528 = vmul.f32 %v1521, %v1526
    %v1529 = vadd.f32 %v1527, %v1528
    %v1530 = vtanh.pop %v1529
    %v1531 = vmul.f32 %v1525, %v1530
    %v1532 = vld [vmem:[%s4] sm:$0x1]
    %v1534 = vlaneseq
    %v1535 = vshrl.u32 %v1534, 7
    %v1536 = vsub.s32 0, %v1535
    %v1537 = vrot.slane %v1532, %v1536
    %v1539 = vmul.f32 %v1531, %v1537
    %v1540 = vld [vmem:[#allocation7] sm:$0x1]
    %v1542 = vlaneseq
    %v1543 = vshrl.u32 %v1542, 7
    %v1544 = vsub.s32 0, %v1543
    %v1545 = vrot.slane %v1540, %v1544
    %v1547 = vadd.f32 %v1539, %v1545
    %v1548 = vmax.f32 %v1547, 0.0
    %v1549 = vpack.c.bf16 %v1548, %v1548
    %v1550 = vld [vmem:[#allocation8] sm:$0xff]
    %v1551 = vld [vmem:[#allocation8 + $0x8] sm:$0xf]
    %v1552 = vld [vmem:[#allocation8 + $0xc] sm:$0xff]
    %v1553 = vld [vmem:[#allocation8 + $0x14] sm:$0xf]
    %v1554 = vld [vmem:[#allocation8 + $0x18] sm:$0xff]
    %v1555 = vld [vmem:[#allocation8 + $0x20] sm:$0xf]
    %v1556 = vld [vmem:[#allocation8 + $0x24] sm:$0xff]
    %v1557 = vld [vmem:[#allocation8 + $0x2c] sm:$0xf]
    %v1558 = vld [vmem:[#allocation8 + $0x30] sm:$0xff]
    %v1559 = vld [vmem:[#allocation8 + $0x38] sm:$0xf]
    %v1560 = vld [vmem:[#allocation8 + $0x3c] sm:$0xff]
    %v1561 = vld [vmem:[#allocation8 + $0x44] sm:$0xf]
    %v1562 = vld [vmem:[#allocation8 + $0x48] sm:$0xff]
    %v1563 = vld [vmem:[#allocation8 + $0x50] sm:$0xf]
    %v1564 = vld [vmem:[#allocation8 + $0x54] sm:$0xff]
    %v1565 = vld [vmem:[#allocation8 + $0x5c] sm:$0xf]
    %v1566 = vld [vmem:[#allocation8 + $0x60] sm:$0xff]
    %v1567 = vld [vmem:[#allocation8 + $0x68] sm:$0xf]
    %v1568 = vld [vmem:[#allocation8 + $0x6c] sm:$0xff]
    %v1569 = vld [vmem:[#allocation8 + $0x74] sm:$0xf]
    %v1570 = vld [vmem:[#allocation8 + $0x78] sm:$0xff]
    %v1571 = vld [vmem:[#allocation8 + $0x80] sm:$0xf]
    %v1572 = vld [vmem:[#allocation8 + $0x84] sm:$0xff]
    %v1573 = vld [vmem:[#allocation8 + $0x8c] sm:$0xf]
    %v1574 = vld [vmem:[#allocation8 + $0x90] sm:$0xff]
    %v1575 = vld [vmem:[#allocation8 + $0x98] sm:$0xf]
    %v1576 = vld [vmem:[#allocation8 + $0x9c] sm:$0xff]
    %v1577 = vld [vmem:[#allocation8 + $0xa4] sm:$0xf]
    %v1578 = vld [vmem:[#allocation8 + $0xa8] sm:$0xff]
    %v1579 = vld [vmem:[#allocation8 + $0xb0] sm:$0xf]
    %v1580 = vld [vmem:[#allocation8 + $0xb4] sm:$0xff]
    %v1581 = vld [vmem:[#allocation8 + $0xbc] sm:$0xf]
    %v1582 = vld [vmem:[#allocation10] sm:$0x7]
    %v1584 = vlaneseq
    %v1585 = vshrl.u32 %v1584, 7
    %v1586 = vsub.s32 0, %v1585
    %v1587 = vrot.slane %v1582, %v1586
    %v1588 = vlaneseq
    %v1589 = vshrl.u32 %v1588, 7
    %v1590 = vsub.s32 1, %v1589
    %v1591 = vrot.slane %v1582, %v1590
    %v1592 = vlaneseq
    %v1593 = vshrl.u32 %v1592, 7
    %v1594 = vsub.s32 2, %v1593
    %v1595 = vrot.slane %v1582, %v1594
    %v1631 = vunpack.c.l.b16 %v1550
    %v1632 = vunpack.c.h.b16 %v1550
    %v1633 = vunpack.c.l.b16 %v1551
    %v1634 = vunpack.c.l.b16 %v1552
    %v1635 = vunpack.c.h.b16 %v1552
    %v1636 = vunpack.c.l.b16 %v1553
    %v1637 = vunpack.c.l.b16 %v1554
    %v1638 = vunpack.c.h.b16 %v1554
    %v1639 = vunpack.c.l.b16 %v1555
    %v1640 = vunpack.c.l.b16 %v1556
    %v1641 = vunpack.c.h.b16 %v1556
    %v1642 = vunpack.c.l.b16 %v1557
    %v1643 = vunpack.c.l.b16 %v1558
    %v1644 = vunpack.c.h.b16 %v1558
    %v1645 = vunpack.c.l.b16 %v1559
    %v1646 = vunpack.c.l.b16 %v1560
    %v1647 = vunpack.c.h.b16 %v1560
    %v1648 = vunpack.c.l.b16 %v1561
    %v1649 = vunpack.c.l.b16 %v1562
    %v1650 = vunpack.c.h.b16 %v1562
    %v1651 = vunpack.c.l.b16 %v1563
    %v1652 = vunpack.c.l.b16 %v1564
    %v1653 = vunpack.c.h.b16 %v1564
    %v1654 = vunpack.c.l.b16 %v1565
    %v1655 = vunpack.c.l.b16 %v1566
    %v1656 = vunpack.c.h.b16 %v1566
    %v1657 = vunpack.c.l.b16 %v1567
    %v1658 = vunpack.c.l.b16 %v1568
    %v1659 = vunpack.c.h.b16 %v1568
    %v1660 = vunpack.c.l.b16 %v1569
    %v1661 = vunpack.c.l.b16 %v1570
    %v1662 = vunpack.c.h.b16 %v1570
    %v1663 = vunpack.c.l.b16 %v1571
    %v1664 = vunpack.c.l.b16 %v1572
    %v1665 = vunpack.c.h.b16 %v1572
    %v1666 = vunpack.c.l.b16 %v1573
    %v1667 = vunpack.c.l.b16 %v1574
    %v1668 = vunpack.c.h.b16 %v1574
    %v1669 = vunpack.c.l.b16 %v1575
    %v1670 = vunpack.c.l.b16 %v1576
    %v1671 = vunpack.c.h.b16 %v1576
    %v1672 = vunpack.c.l.b16 %v1577
    %v1673 = vunpack.c.l.b16 %v1578
    %v1674 = vunpack.c.h.b16 %v1578
    %v1675 = vunpack.c.l.b16 %v1579
    %v1676 = vunpack.c.l.b16 %v1580
    %v1677 = vunpack.c.h.b16 %v1580
    %v1678 = vunpack.c.l.b16 %v1581
    %v1679 = vpack.c.b16 %v1634, %v1631
    %v1680 = vpack.c.b16 %v1635, %v1632
    %v1681 = vpack.c.b16 %v1636, %v1633
    %v1682 = vpack.c.b16 %v1640, %v1637
    %v1683 = vpack.c.b16 %v1641, %v1638
    %v1684 = vpack.c.b16 %v1642, %v1639
    %v1685 = vpack.c.b16 %v1646, %v1643
    %v1686 = vpack.c.b16 %v1647, %v1644
    %v1687 = vpack.c.b16 %v1648, %v1645
    %v1688 = vpack.c.b16 %v1652, %v1649
    %v1689 = vpack.c.b16 %v1653, %v1650
    %v1690 = vpack.c.b16 %v1654, %v1651
    %v1691 = vpack.c.b16 %v1658, %v1655
    %v1692 = vpack.c.b16 %v1659, %v1656
    %v1693 = vpack.c.b16 %v1660, %v1657
    %v1694 = vpack.c.b16 %v1664, %v1661
    %v1695 = vpack.c.b16 %v1665, %v1662
    %v1696 = vpack.c.b16 %v1666, %v1663
    %v1697 = vpack.c.b16 %v1670, %v1667
    %v1698 = vpack.c.b16 %v1671, %v1668
    %v1699 = vpack.c.b16 %v1672, %v1669
    %v1700 = vpack.c.b16 %v1676, %v1673
    %v1701 = vpack.c.b16 %v1677, %v1674
    %v1702 = vpack.c.b16 %v1678, %v1675
    %1727 = vmatprep.subr.bf16.mxu0 %v1701
    %1728 = vmatpush1.bf16.msra.mxu0 %v1700
    %1729 = vmatprep.subr.bf16.mxu0 %v1698
    %1730 = vmatpush1.bf16.msra.mxu0 %v1697
    %1731 = vmatprep.subr.bf16.mxu0 %v1695
    %1732 = vmatpush1.bf16.msra.mxu0 %v1694
    %1733 = vmatprep.subr.bf16.mxu0 %v1692
    %1734 = vmatpush1.bf16.msra.mxu0 %v1691
    %1735 = vmatprep.subr.bf16.mxu0 %v1689
    %1736 = vmatpush1.bf16.msra.mxu0 %v1688
    %1737 = vmatprep.subr.bf16.mxu0 %v1686
    %1738 = vmatpush1.bf16.msra.mxu0 %v1685
    %1739 = vmatprep.subr.bf16.mxu0 %v1683
    %1740 = vmatpush1.bf16.msra.mxu0 %v1682
    %1741 = vmatprep.subr.bf16.mxu0 %v1680
    %1742 = vmatpush1.bf16.msra.mxu0 %v1679
    %1743 = vmatprep.subr.bf16.mxu0 0
    %1744 = vmatpush2.bf16.msra.mxu0 0
    %1745 = vmatprep.subr.bf16.mxu0 0
    %1746 = vmatpush2.bf16.msra.mxu0 0
    %1747 = vmatprep.subr.bf16.mxu0 0
    %1748 = vmatpush2.bf16.msra.mxu0 0
    %1749 = vmatprep.subr.bf16.mxu0 0
    %1750 = vmatpush2.bf16.msra.mxu0 0
    %1751 = vmatprep.subr.bf16.mxu0 0
    %1752 = vmatpush2.bf16.msra.mxu0 0
    %1753 = vmatprep.subr.bf16.mxu0 0
    %1754 = vmatpush2.bf16.msra.mxu0 0
    %1755 = vmatprep.subr.bf16.mxu0 0
    %1756 = vmatpush2.bf16.msra.mxu0 0
    %1757 = vmatprep.subr.bf16.mxu0 0
    %1758 = vmatpush2.bf16.msra.mxu0 0
    %1759 = vmatprep.mubr.bf16.mxu0 0
    %1760 = vmatmul.mubr.bf16.gmra.mxu0 %v1549
    %v1761 = vpop.f32.mrf.mxu0
    %v1762 = vadd.f32 %v1587, %v1761
    %v1763 = vpop.f32.mrf.mxu0
    %v1764 = vadd.f32 %v1591, %v1763
    %v1765 = vpop.f32.mrf.mxu0
    %v1766 = vpop.f32.mrf.mxu0
    %1767 = vdwg.mxu0
    %1768 = vmatprep.subr.bf16.mxu0 0
    %1769 = vmatpush1.bf16.msra.mxu0 %v1702
    %1770 = vmatprep.subr.bf16.mxu0 0
    %1771 = vmatpush1.bf16.msra.mxu0 %v1699
    %1772 = vmatprep.subr.bf16.mxu0 0
    %1773 = vmatpush1.bf16.msra.mxu0 %v1696
    %1774 = vmatprep.subr.bf16.mxu0 0
    %1775 = vmatpush1.bf16.msra.mxu0 %v1693
    %1776 = vmatprep.subr.bf16.mxu0 0
    %1777 = vmatpush1.bf16.msra.mxu0 %v1690
    %1778 = vmatprep.subr.bf16.mxu0 0
    %1779 = vmatpush1.bf16.msra.mxu0 %v1687
    %1780 = vmatprep.subr.bf16.mxu0 0
    %1781 = vmatpush1.bf16.msra.mxu0 %v1684
    %1782 = vmatprep.subr.bf16.mxu0 0
    %1783 = vmatpush1.bf16.msra.mxu0 %v1681
    %1784 = vmatprep.subr.bf16.mxu0 0
    %1785 = vmatpush2.bf16.msra.mxu0 0
    %1786 = vmatprep.subr.bf16.mxu0 0
    %1787 = vmatpush2.bf16.msra.mxu0 0
    %1788 = vmatprep.subr.bf16.mxu0 0
    %1789 = vmatpush2.bf16.msra.mxu0 0
    %1790 = vmatprep.subr.bf16.mxu0 0
    %1791 = vmatpush2.bf16.msra.mxu0 0
    %1792 = vmatprep.subr.bf16.mxu0 0
    %1793 = vmatpush2.bf16.msra.mxu0 0
    %1794 = vmatprep.subr.bf16.mxu0 0
    %1795 = vmatpush2.bf16.msra.mxu0 0
    %1796 = vmatprep.subr.bf16.mxu0 0
    %1797 = vmatpush2.bf16.msra.mxu0 0
    %1798 = vmatprep.subr.bf16.mxu0 0
    %1799 = vmatpush2.bf16.msra.mxu0 0
    %1800 = vmatprep.mubr.bf16.mxu0 0
    %1801 = vmatmul.mubr.bf16.gmra.mxu0 %v1549
    %v1802 = vpop.f32.mrf.mxu0
    %v1803 = vadd.f32 %v1595, %v1802
    %v1804 = vpop.f32.mrf.mxu0
    %v1805 = vpop.f32.mrf.mxu0
    %v1806 = vpop.f32.mrf.mxu0
    %1807 = vdwg.mxu0
    %v1808 = vxor.u32 %v1762, 2147483648
    %v1809 = vxor.u32 %v1764, 2147483648
    %v1810 = vmul.f32 %v1808, 1.442695
    %v1811 = vpow.pop %v1810
    %v1812 = vmul.f32 %v1809, 1.442695
    %v1813 = vpow.pop %v1812
    %v1814 = vadd.f32 %v1811, 1.0
    %v1815 = vadd.f32 %v1813, 1.0
    %v1816 = vrcp.pop %v1814
    %v1817 = vmul.f32 1.0, %v1816
    %v1818 = vrcp.pop %v1815
    %v1819 = vmul.f32 1.0, %v1818
    %v1820 = vtanh.pop %v1803
    %v1821 = vmul.f32 %v1817, %v1820
    %v1822 = vtanh.pop %v1821
    %v1823 = vmul.f32 %v1819, %v1822
    %v1824 = vpack.c.bf16 %v1823, %v1823
    %v1825 = vld [vmem:[#allocation11] sm:$0xf]
    %v1826 = vld [vmem:[#allocation11 + $0x4] sm:$0xf]
    %v1827 = vld [vmem:[#allocation11 + $0x8] sm:$0xf]
    %v1828 = vld [vmem:[#allocation11 + $0xc] sm:$0xf]
    %v1829 = vld [vmem:[#allocation11 + $0x10] sm:$0xf]
    %v1830 = vld [vmem:[#allocation11 + $0x14] sm:$0xf]
    %v1831 = vld [vmem:[#allocation11 + $0x18] sm:$0xf]
    %v1832 = vld [vmem:[#allocation11 + $0x1c] sm:$0xf]
    %v1833 = vld [vmem:[#allocation11 + $0x20] sm:$0xf]
    %v1834 = vld [vmem:[#allocation11 + $0x24] sm:$0xf]
    %v1835 = vld [vmem:[#allocation11 + $0x28] sm:$0xf]
    %v1836 = vld [vmem:[#allocation11 + $0x2c] sm:$0xf]
    %v1837 = vld [vmem:[#allocation11 + $0x30] sm:$0xf]
    %v1838 = vld [vmem:[#allocation11 + $0x34] sm:$0xf]
    %v1839 = vld [vmem:[#allocation11 + $0x38] sm:$0xf]
    %v1840 = vld [vmem:[#allocation11 + $0x3c] sm:$0xf]
    %v1841 = vld [vmem:[#allocation13] sm:$0x1]
    %v1843 = vlaneseq
    %v1844 = vshrl.u32 %v1843, 7
    %v1845 = vsub.s32 0, %v1844
    %v1846 = vrot.slane %v1841, %v1845
    %v1864 = vunpack.c.l.b16 %v1825
    %v1865 = vunpack.c.l.b16 %v1826
    %v1866 = vunpack.c.l.b16 %v1827
    %v1867 = vunpack.c.l.b16 %v1828
    %v1868 = vunpack.c.l.b16 %v1829
    %v1869 = vunpack.c.l.b16 %v1830
    %v1870 = vunpack.c.l.b16 %v1831
    %v1871 = vunpack.c.l.b16 %v1832
    %v1872 = vunpack.c.l.b16 %v1833
    %v1873 = vunpack.c.l.b16 %v1834
    %v1874 = vunpack.c.l.b16 %v1835
    %v1875 = vunpack.c.l.b16 %v1836
    %v1876 = vunpack.c.l.b16 %v1837
    %v1877 = vunpack.c.l.b16 %v1838
    %v1878 = vunpack.c.l.b16 %v1839
    %v1879 = vunpack.c.l.b16 %v1840
    %v1880 = vpack.c.b16 %v1865, %v1864
    %v1881 = vpack.c.b16 %v1867, %v1866
    %v1882 = vpack.c.b16 %v1869, %v1868
    %v1883 = vpack.c.b16 %v1871, %v1870
    %v1884 = vpack.c.b16 %v1873, %v1872
    %v1885 = vpack.c.b16 %v1875, %v1874
    %v1886 = vpack.c.b16 %v1877, %v1876
    %v1887 = vpack.c.b16 %v1879, %v1878
    %1896 = vmatprep.subr.bf16.mxu0 0
    %1897 = vmatpush1.bf16.msra.mxu0 %v1887
    %1898 = vmatprep.subr.bf16.mxu0 0
    %1899 = vmatpush1.bf16.msra.mxu0 %v1886
    %1900 = vmatprep.subr.bf16.mxu0 0
    %1901 = vmatpush1.bf16.msra.mxu0 %v1885
    %1902 = vmatprep.subr.bf16.mxu0 0
    %1903 = vmatpush1.bf16.msra.mxu0 %v1884
    %1904 = vmatprep.subr.bf16.mxu0 0
    %1905 = vmatpush1.bf16.msra.mxu0 %v1883
    %1906 = vmatprep.subr.bf16.mxu0 0
    %1907 = vmatpush1.bf16.msra.mxu0 %v1882
    %1908 = vmatprep.subr.bf16.mxu0 0
    %1909 = vmatpush1.bf16.msra.mxu0 %v1881
    %1910 = vmatprep.subr.bf16.mxu0 0
    %1911 = vmatpush1.bf16.msra.mxu0 %v1880
    %1912 = vmatprep.subr.bf16.mxu0 0
    %1913 = vmatpush2.bf16.msra.mxu0 0
    %1914 = vmatprep.subr.bf16.mxu0 0
    %1915 = vmatpush2.bf16.msra.mxu0 0
    %1916 = vmatprep.subr.bf16.mxu0 0
    %1917 = vmatpush2.bf16.msra.mxu0 0
    %1918 = vmatprep.subr.bf16.mxu0 0
    %1919 = vmatpush2.bf16.msra.mxu0 0
    %1920 = vmatprep.subr.bf16.mxu0 0
    %1921 = vmatpush2.bf16.msra.mxu0 0
    %1922 = vmatprep.subr.bf16.mxu0 0
    %1923 = vmatpush2.bf16.msra.mxu0 0
    %1924 = vmatprep.subr.bf16.mxu0 0
    %1925 = vmatpush2.bf16.msra.mxu0 0
    %1926 = vmatprep.subr.bf16.mxu0 0
    %1927 = vmatpush2.bf16.msra.mxu0 0
    %1928 = vmatprep.mubr.bf16.mxu0 0
    %1929 = vmatmul.mubr.bf16.gmra.mxu0 %v1824
    %v1930 = vpop.f32.mrf.mxu0
    %v1931 = vadd.f32 %v1846, %v1930
    %v1932 = vpop.f32.mrf.mxu0
    %v1933 = vpop.f32.mrf.mxu0
    %v1934 = vpop.f32.mrf.mxu0
    %1935 = vdwg.mxu0
    %v1936 = vmax.f32 %v1931, 0.0
    %v1937 = vpack.c.bf16 %v1936, %v1936
    %v1938 = vld [vmem:[%s10] sm:$0xf]
    %v1939 = vld [vmem:[%s10 + $0x4] sm:$0xf]
    %v1940 = vld [vmem:[%s10 + $0x8] sm:$0xf]
    %v1941 = vld [vmem:[%s10 + $0xc] sm:$0xf]
    %v1942 = vld [vmem:[%s10 + $0x10] sm:$0xf]
    %v1943 = vld [vmem:[%s10 + $0x14] sm:$0xf]
    %v1944 = vld [vmem:[%s10 + $0x18] sm:$0xf]
    %v1945 = vld [vmem:[%s10 + $0x1c] sm:$0xf]
    %v1946 = vld [vmem:[%s10 + $0x20] sm:$0xf]
    %v1947 = vld [vmem:[%s10 + $0x24] sm:$0xf]
    %v1948 = vld [vmem:[%s10 + $0x28] sm:$0xf]
    %v1949 = vld [vmem:[%s10 + $0x2c] sm:$0xf]
    %v1950 = vld [vmem:[%s10 + $0x30] sm:$0xf]
    %v1951 = vld [vmem:[%s10 + $0x34] sm:$0xf]
    %v1952 = vld [vmem:[%s10 + $0x38] sm:$0xf]
    %v1953 = vld [vmem:[%s10 + $0x3c] sm:$0xf]
    %v1954 = vld [vmem:[#allocation14] sm:$0x1]
    %v1956 = vlaneseq
    %v1957 = vshrl.u32 %v1956, 7
    %v1958 = vsub.s32 0, %v1957
    %v1959 = vrot.slane %v1954, %v1958
    %v1977 = vunpack.c.l.b16 %v1938
    %v1978 = vunpack.c.l.b16 %v1939
    %v1979 = vunpack.c.l.b16 %v1940
    %v1980 = vunpack.c.l.b16 %v1941
    %v1981 = vunpack.c.l.b16 %v1942
    %v1982 = vunpack.c.l.b16 %v1943
    %v1983 = vunpack.c.l.b16 %v1944
    %v1984 = vunpack.c.l.b16 %v1945
    %v1985 = vunpack.c.l.b16 %v1946
    %v1986 = vunpack.c.l.b16 %v1947
    %v1987 = vunpack.c.l.b16 %v1948
    %v1988 = vunpack.c.l.b16 %v1949
    %v1989 = vunpack.c.l.b16 %v1950
    %v1990 = vunpack.c.l.b16 %v1951
    %v1991 = vunpack.c.l.b16 %v1952
    %v1992 = vunpack.c.l.b16 %v1953
    %v1993 = vpack.c.b16 %v1978, %v1977
    %v1994 = vpack.c.b16 %v1980, %v1979
    %v1995 = vpack.c.b16 %v1982, %v1981
    %v1996 = vpack.c.b16 %v1984, %v1983
    %v1997 = vpack.c.b16 %v1986, %v1985
    %v1998 = vpack.c.b16 %v1988, %v1987
    %v1999 = vpack.c.b16 %v1990, %v1989
    %v2000 = vpack.c.b16 %v1992, %v1991
    %2009 = vmatprep.subr.bf16.mxu0 0
    %2010 = vmatpush1.bf16.msra.mxu0 %v2000
    %2011 = vmatprep.subr.bf16.mxu0 0
    %2012 = vmatpush1.bf16.msra.mxu0 %v1999
    %2013 = vmatprep.subr.bf16.mxu0 0
    %2014 = vmatpush1.bf16.msra.mxu0 %v1998
    %2015 = vmatprep.subr.bf16.mxu0 0
    %2016 = vmatpush1.bf16.msra.mxu0 %v1997
    %2017 = vmatprep.subr.bf16.mxu0 0
    %2018 = vmatpush1.bf16.msra.mxu0 %v1996
    %2019 = vmatprep.subr.bf16.mxu0 0
    %2020 = vmatpush1.bf16.msra.mxu0 %v1995
    %2021 = vmatprep.subr.bf16.mxu0 0
    %2022 = vmatpush1.bf16.msra.mxu0 %v1994
    %2023 = vmatprep.subr.bf16.mxu0 0
    %2024 = vmatpush1.bf16.msra.mxu0 %v1993
    %2025 = vmatprep.subr.bf16.mxu0 0
    %2026 = vmatpush2.bf16.msra.mxu0 0
    %2027 = vmatprep.subr.bf16.mxu0 0
    %2028 = vmatpush2.bf16.msra.mxu0 0
    %2029 = vmatprep.subr.bf16.mxu0 0
    %2030 = vmatpush2.bf16.msra.mxu0 0
    %2031 = vmatprep.subr.bf16.mxu0 0
    %2032 = vmatpush2.bf16.msra.mxu0 0
    %2033 = vmatprep.subr.bf16.mxu0 0
    %2034 = vmatpush2.bf16.msra.mxu0 0
    %2035 = vmatprep.subr.bf16.mxu0 0
    %2036 = vmatpush2.bf16.msra.mxu0 0
    %2037 = vmatprep.subr.bf16.mxu0 0
    %2038 = vmatpush2.bf16.msra.mxu0 0
    %2039 = vmatprep.subr.bf16.mxu0 0
    %2040 = vmatpush2.bf16.msra.mxu0 0
    %2041 = vmatprep.mubr.bf16.mxu0 0
    %2042 = vmatmul.mubr.bf16.gmra.mxu0 %v1937
    %v2043 = vpop.f32.mrf.mxu0
    %v2044 = vadd.f32 %v1959, %v2043
    %v2045 = vpop.f32.mrf.mxu0
    %v2046 = vpop.f32.mrf.mxu0
    %v2047 = vpop.f32.mrf.mxu0
    %2048 = vdwg.mxu0
    %2049 = vst [vmem:[%s12] sm:$0xff] %v2044
    // Predicated region
    $region82: #{kpnet_forward.1} parent=1 // pred_check
      _
    $region83: #{kpnet_forward.1} parent=1 // pred_check_branch
      %2051 = sbr.rel (0) target = $region85
    $region84: #{kpnet_forward.1} parent=1 // pred_region
      _
    $region85: #{kpnet_forward.1} parent=1 // pred_fallthru
      _
    // Predicated region
    $region86: #{kpnet_forward.1} parent=1 // pred_check
      _
    $region87: #{kpnet_forward.1} parent=1 // pred_check_branch
      %2053 = sbr.rel (0) target = $region89
    $region88: #{kpnet_forward.1} parent=1 // pred_region
      _
    $region89: #{kpnet_forward.1} parent=1 // pred_fallthru
      _
    %2054 = vsyncpa [#allocation4], 1
    %2055 = vsyncpa [#allocation6], 1
    %2056 = vsyncpa [#allocation9], 1
    %2057 = vsyncpa [#allocation12], 1
    %2058 = vsyncpa [#allocation15], 1

</llo_original>
